<compile_context>
chip_gen: v5e
topology: v5e:2x2
jax: 0.10.0
libtpu: 0.0.40
codegen_flags: <defaults>
</compile_context>

<pallas_src>
import functools

import jax
import jax.numpy as jnp
from jax import lax
from jax.experimental import pallas as pl
from jax.experimental.pallas import tpu as pltpu

C1 = 0.01 ** 2
C2 = 0.03 ** 2

# TODO(synk): the drop in {'L','C','S','LC'} (sqrt-of-sigma) variants and
# size_average=False are not implemented; the module defaults (drop=None,
# size_average=True) are reproduced.


def _conv_out_size(n, window_size, stride):
    pad = (window_size - 1) // 2
    return (n + 2 * pad - window_size) // stride + 1


def _row_selection_matrix(H, window_size, stride):
    """(Hout, H) uniform-window row-conv matrix with the zero pad folded in."""
    pad = (window_size - 1) // 2
    Hout = _conv_out_size(H, window_size, stride)
    off = jnp.arange(H)[None, :] + pad - stride * jnp.arange(Hout)[:, None]
    R = jnp.where((off >= 0) & (off < window_size), 1.0 / window_size, 0.0)
    return R.astype(jnp.float32), Hout


def _ssim_kernel(x1_ref, x2_ref, r_ref, tap_ref, sel_ref, o_ref, halo_ref, *,
                 window_size, pad, hout):
    """One grid step: TB lane-packed slabs -> per-(slab,column) SSIM sums.

    x1_ref/x2_ref : (1, H, L)      lane-packed image slabs, L = TB*W
    r_ref         : (Hout, H)      shared row-conv selection matrix (1/ws taps)
    tap_ref       : (ws, L)        per-lane column-conv tap weights (slab-edge aware)
    sel_ref       : (1, L)         1.0 at the strided output columns, else 0.0
    o_ref         : (1, 1, L)      per-(slab, column) sums of the SSIM map
    halo_ref      : (Hout, L+2*pad) VMEM scratch providing a zero halo for the
                                    lane-direction (column) convolution.
    """
    x1 = x1_ref[0]                        # (H, L) f32
    x2 = x2_ref[0]
    L = x1.shape[-1]
    R = r_ref[...]
    taps = tap_ref[...]                   # (ws, L)
    hi = lax.Precision.HIGHEST

    def row_conv(v):                      # (H, L) -> (Hout, L), MXU
        return jnp.dot(R, v, preferred_element_type=jnp.float32, precision=hi)

    t_mu1 = row_conv(x1)
    t_mu2 = row_conv(x2)
    t_e11 = row_conv(x1 * x1)
    t_e22 = row_conv(x2 * x2)
    t_e12 = row_conv(x1 * x2)

    # Zero the halo columns so the 0-weight taps at the ends of the packed row
    # never multiply uninitialised VMEM (0 * NaN would poison the sum).
    if pad > 0:
        zeros_halo = jnp.zeros((hout, pad), jnp.float32)
        halo_ref[:, :pad] = zeros_halo
        halo_ref[:, pad + L:] = zeros_halo

    def col_conv(t):                      # (Hout, L) -> (Hout, L), VPU loads
        # halo[:, pad + k] = t[:, k];  slice starting at d reads t[:, k-pad+d].
        halo_ref[:, pad:pad + L] = t
        acc = taps[0:1, :] * halo_ref[:, 0:L]
        for d in range(1, window_size):
            acc = acc + taps[d:d + 1, :] * halo_ref[:, d:d + L]
        return acc

    mu1 = col_conv(t_mu1)
    mu2 = col_conv(t_mu2)
    e11 = col_conv(t_e11)
    e22 = col_conv(t_e22)
    e12 = col_conv(t_e12)

    mu1_sq = mu1 * mu1
    mu2_sq = mu2 * mu2
    mu1_mu2 = mu1 * mu2
    sigma1_sq = e11 - mu1_sq
    sigma2_sq = e22 - mu2_sq
    sigma12 = e12 - mu1_mu2

    num = (2.0 * mu1_mu2 + C1) * (2.0 * sigma12 + C2)
    den = (mu1_sq + mu2_sq + C1) * (sigma1_sq + sigma2_sq + C2)
    # approx reciprocal (EUP slot): adds ~2^-12 relative error per element.
    ssim_map = num * pl.reciprocal(den, approx=True)

    # Keep only the strided output columns; everything else contributes 0.
    o_ref[0] = jnp.sum(ssim_map * sel_ref[...], axis=0, keepdims=True)


def _vmem_limit_and_budget():
    cap = 64 * 1024 * 1024            # conservative default: v7x per-TC VMEM
    try:
        cap = int(pltpu.get_tpu_info().vmem_capacity_bytes)
    except Exception:
        pass
    cap = max(cap, 32 * 1024 * 1024)
    return int(cap * 0.75), int(cap * 0.35)


def _pick_tb(BC, H, W, Hout, budget_bytes):
    """Slabs per grid step: lane-dense L = TB*W, G >= 2 on v7x, fits VMEM."""
    def step_bytes(tb):
        L = tb * W
        # x1/x2 double-buffered (4*H*L) + products (3*H*L) + row/col-conv and
        # elementwise temporaries (~22*Hout*L), all f32 (upper bound; the
        # compiler reuses most temporaries).
        return 4 * L * (7 * H + 22 * Hout)

    tb_max = 1
    for tb in range(1, BC + 1):
        if tb > 1 and step_bytes(tb) > budget_bytes:
            break
        tb_max = tb

    def dense(tb):
        return (tb * W) % 128 == 0

    tb = max(range(1, tb_max + 1), key=lambda t: (dense(t), t * W >= 128, t))

    # Prefer G >= 2 so both v7x TensorCores get work (near-free on v5e/v6e),
    # unless that would give up a lane-dense (multiple-of-128) packing.
    if BC > 1 and pl.cdiv(BC, tb) < 2:
        half = pl.cdiv(BC, 2)
        if dense(half) or not dense(tb):
            tb = half
    return tb


def local_glance(img1, img2, window_size=3, stride=3):
    """Pallas implementation of LocalGlance.forward (size_average=True, drop=None)."""
    B, C, H, W = img1.shape
    pad = (window_size - 1) // 2
    R, Hout = _row_selection_matrix(H, window_size, stride)
    Wout = _conv_out_size(W, window_size, stride)

    BC = B * C
    vmem_limit, budget = _vmem_limit_and_budget()
    TB = _pick_tb(BC, H, W, Hout, budget)
    G = pl.cdiv(BC, TB)
    BCp = G * TB
    L = TB * W
    # TODO(synk): for very large H*W a second grid axis tiling W (with per-tile
    # halo columns) is needed to keep one slab inside the VMEM budget.

    def prep(x):
        x = x.astype(jnp.float32).reshape(BC, H, W)
        if BCp != BC:
            x = jnp.pad(x, ((0, BCp - BC), (0, 0), (0, 0)))   # dummy slabs
        if TB == 1:
            return x                                           # already (G,H,L)
        # Lane-pack TB slabs side by side along W: (G, H, TB*W).
        # TODO(synk): this packing is one extra HBM pass over the images; it
        # could be expressed through the BlockSpec over the original layout
        # (block (TB,H,W)) at the cost of an in-kernel relayout, or fused with
        # a bf16 cast when streaming bf16 inputs on v7x.
        return x.reshape(G, TB, H, W).transpose(0, 2, 1, 3).reshape(G, H, L)

    x1 = prep(img1)
    x2 = prep(img2)

    # Column-conv tap weights per lane (slab-boundary aware) and the strided
    # output-column selection mask, precomputed once in the wrapper.
    col = jnp.arange(L, dtype=jnp.int32) % W
    tapw = []
    for d in range(window_size):
        src = col + (d - pad)
        tapw.append(jnp.where((src >= 0) & (src < W), 1.0 / window_size, 0.0))
    tapw = jnp.stack(tapw).astype(jnp.float32)                         # (ws, L)
    sel = jnp.where((col % stride == 0) & (col <= stride * (Wout - 1)),
                    1.0, 0.0).astype(jnp.float32)[None, :]             # (1, L)

    kernel = functools.partial(
        _ssim_kernel, window_size=window_size, pad=pad, hout=Hout)

    out = pl.pallas_call(
        kernel,
        out_shape=jax.ShapeDtypeStruct((G, 1, L), jnp.float32),
        grid_spec=pltpu.PrefetchScalarGridSpec(
            num_scalar_prefetch=0,
            grid=(G,),
            in_specs=[
                pl.BlockSpec((1, H, L), lambda g: (g, 0, 0)),
                pl.BlockSpec((1, H, L), lambda g: (g, 0, 0)),
                # Grid-invariant small weights/masks: DMA'd once.
                pl.BlockSpec((Hout, H), lambda g: (0, 0)),
                pl.BlockSpec((window_size, L), lambda g: (0, 0)),
                pl.BlockSpec((1, L), lambda g: (0, 0)),
            ],
            out_specs=pl.BlockSpec((1, 1, L), lambda g: (g, 0, 0)),
            scratch_shapes=[pltpu.VMEM((Hout, L + 2 * pad), jnp.float32)],
        ),
        compiler_params=pltpu.CompilerParams(
            dimension_semantics=("parallel",),
            vmem_limit_bytes=vmem_limit,
        ),
    )(x1, x2, R, tapw, sel)

    # Per-(slab, column) partial sums; drop the zero-padded dummy slabs and
    # finish the global mean in JAX (no serial scalar accumulator in-kernel).
    per_col = out.reshape(BCp, W)[:BC]
    return jnp.sum(per_col) / jnp.float32(BC * Hout * Wout)


def ref_local_glance(img1, img2, window_size=3, stride=3):
    """Pure-JAX reference (no Pallas, no matmul) of the same math."""
    B, C, H, W = img1.shape
    pad = (window_size - 1) // 2
    Hout = _conv_out_size(H, window_size, stride)
    Wout = _conv_out_size(W, window_size, stride)

    def conv(x):
        xp = jnp.pad(x.reshape(B * C, H, W).astype(jnp.float32),
                     ((0, 0), (pad, pad), (pad, pad)))
        acc = jnp.zeros((B * C, Hout, Wout), jnp.float32)
        for di in range(window_size):
            for dj in range(window_size):
                acc = acc + xp[:,
                               di:di + stride * (Hout - 1) + 1:stride,
                               dj:dj + stride * (Wout - 1) + 1:stride]
        return acc / (window_size * window_size)

    mu1, mu2 = conv(img1), conv(img2)
    s1 = conv(img1 * img1) - mu1 * mu1
    s2 = conv(img2 * img2) - mu2 * mu2
    s12 = conv(img1 * img2) - mu1 * mu2
    m = (2 * mu1 * mu2 + C1) * (2 * s12 + C2) / (
        (mu1 * mu1 + mu2 * mu2 + C1) * (s1 + s2 + C2))
    return m.mean()


if __name__ == "__main__":
    key = jax.random.PRNGKey(0)
    k1, k2 = jax.random.split(key)
    # [b, 2, h, w] per the module docstring (real/imag channels).
    B, C, H, W = 2, 2, 16, 16
    img1 = jax.random.normal(k1, (B, C, H, W), dtype=jnp.float32)
    img2 = jax.random.normal(k2, (B, C, H, W), dtype=jnp.float32)

    out = jax.block_until_ready(local_glance(img1, img2))
    assert jnp.isfinite(out)

    # Sanity: identical inputs -> SSIM map is ~1 (only approx-reciprocal error).
    out_same = jax.block_until_ready(local_glance(img1, img1))
    assert abs(float(out_same) - 1.0) < 5e-3, float(out_same)

    # Cross-check against pure-JAX reference.
    ref = jax.block_until_ready(ref_local_glance(img1, img2))
    assert abs(float(out) - float(ref)) < 2e-2, (float(out), float(ref))

    print("KERNEL_OK")
</pallas_src>

<mosaic_0001>
module attributes {stable_mosaic.version = 11 : i64} {
  func.func @_ssim_kernel(%arg0: i32, %arg1: memref<1x16x32xf32, #tpu.memory_space<vmem>>, %arg2: memref<1x16x32xf32, #tpu.memory_space<vmem>>, %arg3: memref<6x16xf32, #tpu.memory_space<vmem>>, %arg4: memref<3x32xf32, #tpu.memory_space<vmem>>, %arg5: memref<1x32xf32, #tpu.memory_space<vmem>>, %arg6: memref<1x1x32xf32, #tpu.memory_space<vmem>>, %arg7: memref<6x34xf32, #tpu.memory_space<vmem>>) attributes {dimension_semantics = [#tpu.dimension_semantics<parallel>], iteration_bounds = array<i64: 2>, scalar_prefetch = 0 : i64, scratch_operands = 1 : i64, tpu.core_type = #tpu.core_type<tc>, window_params = [{transform_indices = @transform_0, window_bounds = array<i64: 1, 16, 32>}, {transform_indices = @transform_1, window_bounds = array<i64: 1, 16, 32>}, {pipeline_mode = #tpu.pipeline_mode<synchronous>, transform_indices = @transform_2, window_bounds = array<i64: 6, 16>}, {pipeline_mode = #tpu.pipeline_mode<synchronous>, transform_indices = @transform_3, window_bounds = array<i64: 3, 32>}, {pipeline_mode = #tpu.pipeline_mode<synchronous>, transform_indices = @transform_4, window_bounds = array<i64: 1, 32>}, {transform_indices = @transform_5, window_bounds = array<i64: 1, 1, 32>}]} {
    %c0 = arith.constant 0 : index
    %c0_0 = arith.constant 0 : index
    %c0_1 = arith.constant 0 : index
    %0 = vector.load %arg1[%c0, %c0_0, %c0_1] : memref<1x16x32xf32, #tpu.memory_space<vmem>>, vector<1x16x32xf32>
    %1 = vector.shape_cast %0 : vector<1x16x32xf32> to vector<16x32xf32>
    %c0_2 = arith.constant 0 : index
    %c0_3 = arith.constant 0 : index
    %c0_4 = arith.constant 0 : index
    %2 = vector.load %arg2[%c0_2, %c0_3, %c0_4] : memref<1x16x32xf32, #tpu.memory_space<vmem>>, vector<1x16x32xf32>
    %3 = vector.shape_cast %2 : vector<1x16x32xf32> to vector<16x32xf32>
    %c0_5 = arith.constant 0 : index
    %c0_6 = arith.constant 0 : index
    %4 = vector.load %arg3[%c0_5, %c0_6] : memref<6x16xf32, #tpu.memory_space<vmem>>, vector<6x16xf32>
    %c0_7 = arith.constant 0 : index
    %c0_8 = arith.constant 0 : index
    %5 = vector.load %arg4[%c0_7, %c0_8] : memref<3x32xf32, #tpu.memory_space<vmem>>, vector<3x32xf32>
    %cst = arith.constant dense<0.000000e+00> : vector<6x32xf32>
    %6 = tpu.matmul %4, %1, %cst {dimension_numbers = #tpu.dot_dimension_numbers<[1], [0], [0], [1], [0, 0, 1, 1], [], []>, precision = #tpu.contract_precision<fp32>} : vector<6x16xf32>, vector<16x32xf32>, vector<6x32xf32> -> vector<6x32xf32>
    %cst_9 = arith.constant dense<0.000000e+00> : vector<6x32xf32>
    %7 = tpu.matmul %4, %3, %cst_9 {dimension_numbers = #tpu.dot_dimension_numbers<[1], [0], [0], [1], [0, 0, 1, 1], [], []>, precision = #tpu.contract_precision<fp32>} : vector<6x16xf32>, vector<16x32xf32>, vector<6x32xf32> -> vector<6x32xf32>
    %8 = arith.mulf %1, %1 : vector<16x32xf32>
    %cst_10 = arith.constant dense<0.000000e+00> : vector<6x32xf32>
    %9 = tpu.matmul %4, %8, %cst_10 {dimension_numbers = #tpu.dot_dimension_numbers<[1], [0], [0], [1], [0, 0, 1, 1], [], []>, precision = #tpu.contract_precision<fp32>} : vector<6x16xf32>, vector<16x32xf32>, vector<6x32xf32> -> vector<6x32xf32>
    %10 = arith.mulf %3, %3 : vector<16x32xf32>
    %cst_11 = arith.constant dense<0.000000e+00> : vector<6x32xf32>
    %11 = tpu.matmul %4, %10, %cst_11 {dimension_numbers = #tpu.dot_dimension_numbers<[1], [0], [0], [1], [0, 0, 1, 1], [], []>, precision = #tpu.contract_precision<fp32>} : vector<6x16xf32>, vector<16x32xf32>, vector<6x32xf32> -> vector<6x32xf32>
    %12 = arith.mulf %1, %3 : vector<16x32xf32>
    %cst_12 = arith.constant dense<0.000000e+00> : vector<6x32xf32>
    %13 = tpu.matmul %4, %12, %cst_12 {dimension_numbers = #tpu.dot_dimension_numbers<[1], [0], [0], [1], [0, 0, 1, 1], [], []>, precision = #tpu.contract_precision<fp32>} : vector<6x16xf32>, vector<16x32xf32>, vector<6x32xf32> -> vector<6x32xf32>
    %cst_13 = arith.constant 0.000000e+00 : f32
    %14 = vector.broadcast %cst_13 : f32 to vector<6x1xf32>
    %c0_14 = arith.constant 0 : index
    %c0_15 = arith.constant 0 : index
    %15 = vector.load %arg7[%c0_14, %c0_15] : memref<6x34xf32, #tpu.memory_space<vmem>>, vector<6x1xf32>
    tpu.vector_store %arg7[%c0_14, %c0_15], %14 {strides = array<i32>} : memref<6x34xf32, #tpu.memory_space<vmem>>, vector<6x1xf32>,
    %c0_16 = arith.constant 0 : index
    %c33 = arith.constant 33 : index
    %16 = vector.load %arg7[%c0_16, %c33] : memref<6x34xf32, #tpu.memory_space<vmem>>, vector<6x1xf32>
    tpu.vector_store %arg7[%c0_16, %c33], %14 {strides = array<i32>} : memref<6x34xf32, #tpu.memory_space<vmem>>, vector<6x1xf32>,
    %c0_17 = arith.constant 0 : index
    %c1 = arith.constant 1 : index
    %17 = vector.load %arg7[%c0_17, %c1] : memref<6x34xf32, #tpu.memory_space<vmem>>, vector<6x32xf32>
    tpu.vector_store %arg7[%c0_17, %c1], %6 {strides = array<i32>} : memref<6x34xf32, #tpu.memory_space<vmem>>, vector<6x32xf32>,
    %18 = vector.extract_strided_slice %5 {offsets = [0, 0], sizes = [1, 32], strides = [1, 1]} : vector<3x32xf32> to vector<1x32xf32>
    %c0_18 = arith.constant 0 : index
    %c0_19 = arith.constant 0 : index
    %19 = vector.load %arg7[%c0_18, %c0_19] : memref<6x34xf32, #tpu.memory_space<vmem>>, vector<6x32xf32>
    %20 = vector.broadcast %18 : vector<1x32xf32> to vector<6x32xf32>
    %21 = arith.mulf %20, %19 : vector<6x32xf32>
    %22 = vector.extract_strided_slice %5 {offsets = [1, 0], sizes = [1, 32], strides = [1, 1]} : vector<3x32xf32> to vector<1x32xf32>
    %c0_20 = arith.constant 0 : index
    %c1_21 = arith.constant 1 : index
    %23 = vector.load %arg7[%c0_20, %c1_21] : memref<6x34xf32, #tpu.memory_space<vmem>>, vector<6x32xf32>
    %24 = vector.broadcast %22 : vector<1x32xf32> to vector<6x32xf32>
    %25 = arith.mulf %24, %23 : vector<6x32xf32>
    %26 = arith.addf %21, %25 : vector<6x32xf32>
    %27 = vector.extract_strided_slice %5 {offsets = [2, 0], sizes = [1, 32], strides = [1, 1]} : vector<3x32xf32> to vector<1x32xf32>
    %c0_22 = arith.constant 0 : index
    %c2 = arith.constant 2 : index
    %28 = vector.load %arg7[%c0_22, %c2] : memref<6x34xf32, #tpu.memory_space<vmem>>, vector<6x32xf32>
    %29 = vector.broadcast %27 : vector<1x32xf32> to vector<6x32xf32>
    %30 = arith.mulf %29, %28 : vector<6x32xf32>
    %31 = arith.addf %26, %30 : vector<6x32xf32>
    %c0_23 = arith.constant 0 : index
    %c1_24 = arith.constant 1 : index
    %32 = vector.load %arg7[%c0_23, %c1_24] : memref<6x34xf32, #tpu.memory_space<vmem>>, vector<6x32xf32>
    tpu.vector_store %arg7[%c0_23, %c1_24], %7 {strides = array<i32>} : memref<6x34xf32, #tpu.memory_space<vmem>>, vector<6x32xf32>,
    %33 = vector.extract_strided_slice %5 {offsets = [0, 0], sizes = [1, 32], strides = [1, 1]} : vector<3x32xf32> to vector<1x32xf32>
    %c0_25 = arith.constant 0 : index
    %c0_26 = arith.constant 0 : index
    %34 = vector.load %arg7[%c0_25, %c0_26] : memref<6x34xf32, #tpu.memory_space<vmem>>, vector<6x32xf32>
    %35 = vector.broadcast %33 : vector<1x32xf32> to vector<6x32xf32>
    %36 = arith.mulf %35, %34 : vector<6x32xf32>
    %37 = vector.extract_strided_slice %5 {offsets = [1, 0], sizes = [1, 32], strides = [1, 1]} : vector<3x32xf32> to vector<1x32xf32>
    %c0_27 = arith.constant 0 : index
    %c1_28 = arith.constant 1 : index
    %38 = vector.load %arg7[%c0_27, %c1_28] : memref<6x34xf32, #tpu.memory_space<vmem>>, vector<6x32xf32>
    %39 = vector.broadcast %37 : vector<1x32xf32> to vector<6x32xf32>
    %40 = arith.mulf %39, %38 : vector<6x32xf32>
    %41 = arith.addf %36, %40 : vector<6x32xf32>
    %42 = vector.extract_strided_slice %5 {offsets = [2, 0], sizes = [1, 32], strides = [1, 1]} : vector<3x32xf32> to vector<1x32xf32>
    %c0_29 = arith.constant 0 : index
    %c2_30 = arith.constant 2 : index
    %43 = vector.load %arg7[%c0_29, %c2_30] : memref<6x34xf32, #tpu.memory_space<vmem>>, vector<6x32xf32>
    %44 = vector.broadcast %42 : vector<1x32xf32> to vector<6x32xf32>
    %45 = arith.mulf %44, %43 : vector<6x32xf32>
    %46 = arith.addf %41, %45 : vector<6x32xf32>
    %c0_31 = arith.constant 0 : index
    %c1_32 = arith.constant 1 : index
    %47 = vector.load %arg7[%c0_31, %c1_32] : memref<6x34xf32, #tpu.memory_space<vmem>>, vector<6x32xf32>
    tpu.vector_store %arg7[%c0_31, %c1_32], %9 {strides = array<i32>} : memref<6x34xf32, #tpu.memory_space<vmem>>, vector<6x32xf32>,
    %48 = vector.extract_strided_slice %5 {offsets = [0, 0], sizes = [1, 32], strides = [1, 1]} : vector<3x32xf32> to vector<1x32xf32>
    %c0_33 = arith.constant 0 : index
    %c0_34 = arith.constant 0 : index
    %49 = vector.load %arg7[%c0_33, %c0_34] : memref<6x34xf32, #tpu.memory_space<vmem>>, vector<6x32xf32>
    %50 = vector.broadcast %48 : vector<1x32xf32> to vector<6x32xf32>
    %51 = arith.mulf %50, %49 : vector<6x32xf32>
    %52 = vector.extract_strided_slice %5 {offsets = [1, 0], sizes = [1, 32], strides = [1, 1]} : vector<3x32xf32> to vector<1x32xf32>
    %c0_35 = arith.constant 0 : index
    %c1_36 = arith.constant 1 : index
    %53 = vector.load %arg7[%c0_35, %c1_36] : memref<6x34xf32, #tpu.memory_space<vmem>>, vector<6x32xf32>
    %54 = vector.broadcast %52 : vector<1x32xf32> to vector<6x32xf32>
    %55 = arith.mulf %54, %53 : vector<6x32xf32>
    %56 = arith.addf %51, %55 : vector<6x32xf32>
    %57 = vector.extract_strided_slice %5 {offsets = [2, 0], sizes = [1, 32], strides = [1, 1]} : vector<3x32xf32> to vector<1x32xf32>
    %c0_37 = arith.constant 0 : index
    %c2_38 = arith.constant 2 : index
    %58 = vector.load %arg7[%c0_37, %c2_38] : memref<6x34xf32, #tpu.memory_space<vmem>>, vector<6x32xf32>
    %59 = vector.broadcast %57 : vector<1x32xf32> to vector<6x32xf32>
    %60 = arith.mulf %59, %58 : vector<6x32xf32>
    %61 = arith.addf %56, %60 : vector<6x32xf32>
    %c0_39 = arith.constant 0 : index
    %c1_40 = arith.constant 1 : index
    %62 = vector.load %arg7[%c0_39, %c1_40] : memref<6x34xf32, #tpu.memory_space<vmem>>, vector<6x32xf32>
    tpu.vector_store %arg7[%c0_39, %c1_40], %11 {strides = array<i32>} : memref<6x34xf32, #tpu.memory_space<vmem>>, vector<6x32xf32>,
    %63 = vector.extract_strided_slice %5 {offsets = [0, 0], sizes = [1, 32], strides = [1, 1]} : vector<3x32xf32> to vector<1x32xf32>
    %c0_41 = arith.constant 0 : index
    %c0_42 = arith.constant 0 : index
    %64 = vector.load %arg7[%c0_41, %c0_42] : memref<6x34xf32, #tpu.memory_space<vmem>>, vector<6x32xf32>
    %65 = vector.broadcast %63 : vector<1x32xf32> to vector<6x32xf32>
    %66 = arith.mulf %65, %64 : vector<6x32xf32>
    %67 = vector.extract_strided_slice %5 {offsets = [1, 0], sizes = [1, 32], strides = [1, 1]} : vector<3x32xf32> to vector<1x32xf32>
    %c0_43 = arith.constant 0 : index
    %c1_44 = arith.constant 1 : index
    %68 = vector.load %arg7[%c0_43, %c1_44] : memref<6x34xf32, #tpu.memory_space<vmem>>, vector<6x32xf32>
    %69 = vector.broadcast %67 : vector<1x32xf32> to vector<6x32xf32>
    %70 = arith.mulf %69, %68 : vector<6x32xf32>
    %71 = arith.addf %66, %70 : vector<6x32xf32>
    %72 = vector.extract_strided_slice %5 {offsets = [2, 0], sizes = [1, 32], strides = [1, 1]} : vector<3x32xf32> to vector<1x32xf32>
    %c0_45 = arith.constant 0 : index
    %c2_46 = arith.constant 2 : index
    %73 = vector.load %arg7[%c0_45, %c2_46] : memref<6x34xf32, #tpu.memory_space<vmem>>, vector<6x32xf32>
    %74 = vector.broadcast %72 : vector<1x32xf32> to vector<6x32xf32>
    %75 = arith.mulf %74, %73 : vector<6x32xf32>
    %76 = arith.addf %71, %75 : vector<6x32xf32>
    %c0_47 = arith.constant 0 : index
    %c1_48 = arith.constant 1 : index
    %77 = vector.load %arg7[%c0_47, %c1_48] : memref<6x34xf32, #tpu.memory_space<vmem>>, vector<6x32xf32>
    tpu.vector_store %arg7[%c0_47, %c1_48], %13 {strides = array<i32>} : memref<6x34xf32, #tpu.memory_space<vmem>>, vector<6x32xf32>,
    %78 = vector.extract_strided_slice %5 {offsets = [0, 0], sizes = [1, 32], strides = [1, 1]} : vector<3x32xf32> to vector<1x32xf32>
    %c0_49 = arith.constant 0 : index
    %c0_50 = arith.constant 0 : index
    %79 = vector.load %arg7[%c0_49, %c0_50] : memref<6x34xf32, #tpu.memory_space<vmem>>, vector<6x32xf32>
    %80 = vector.broadcast %78 : vector<1x32xf32> to vector<6x32xf32>
    %81 = arith.mulf %80, %79 : vector<6x32xf32>
    %82 = vector.extract_strided_slice %5 {offsets = [1, 0], sizes = [1, 32], strides = [1, 1]} : vector<3x32xf32> to vector<1x32xf32>
    %c0_51 = arith.constant 0 : index
    %c1_52 = arith.constant 1 : index
    %83 = vector.load %arg7[%c0_51, %c1_52] : memref<6x34xf32, #tpu.memory_space<vmem>>, vector<6x32xf32>
    %84 = vector.broadcast %82 : vector<1x32xf32> to vector<6x32xf32>
    %85 = arith.mulf %84, %83 : vector<6x32xf32>
    %86 = arith.addf %81, %85 : vector<6x32xf32>
    %87 = vector.extract_strided_slice %5 {offsets = [2, 0], sizes = [1, 32], strides = [1, 1]} : vector<3x32xf32> to vector<1x32xf32>
    %c0_53 = arith.constant 0 : index
    %c2_54 = arith.constant 2 : index
    %88 = vector.load %arg7[%c0_53, %c2_54] : memref<6x34xf32, #tpu.memory_space<vmem>>, vector<6x32xf32>
    %89 = vector.broadcast %87 : vector<1x32xf32> to vector<6x32xf32>
    %90 = arith.mulf %89, %88 : vector<6x32xf32>
    %91 = arith.addf %86, %90 : vector<6x32xf32>
    %92 = arith.mulf %31, %31 : vector<6x32xf32>
    %93 = arith.mulf %46, %46 : vector<6x32xf32>
    %94 = arith.mulf %31, %46 : vector<6x32xf32>
    %95 = arith.subf %61, %92 : vector<6x32xf32>
    %96 = arith.subf %76, %93 : vector<6x32xf32>
    %97 = arith.subf %91, %94 : vector<6x32xf32>
    %cst_55 = arith.constant 2.000000e+00 : f32
    %98 = vector.broadcast %cst_55 : f32 to vector<6x32xf32>
    %99 = arith.mulf %98, %94 : vector<6x32xf32>
    %cst_56 = arith.constant 9.99999974E-5 : f32
    %100 = vector.broadcast %cst_56 : f32 to vector<6x32xf32>
    %101 = arith.addf %99, %100 : vector<6x32xf32>
    %cst_57 = arith.constant 2.000000e+00 : f32
    %102 = vector.broadcast %cst_57 : f32 to vector<6x32xf32>
    %103 = arith.mulf %102, %97 : vector<6x32xf32>
    %cst_58 = arith.constant 8.99999984E-4 : f32
    %104 = vector.broadcast %cst_58 : f32 to vector<6x32xf32>
    %105 = arith.addf %103, %104 : vector<6x32xf32>
    %106 = arith.mulf %101, %105 : vector<6x32xf32>
    %107 = arith.addf %92, %93 : vector<6x32xf32>
    %cst_59 = arith.constant 9.99999974E-5 : f32
    %108 = vector.broadcast %cst_59 : f32 to vector<6x32xf32>
    %109 = arith.addf %107, %108 : vector<6x32xf32>
    %110 = arith.addf %95, %96 : vector<6x32xf32>
    %cst_60 = arith.constant 8.99999984E-4 : f32
    %111 = vector.broadcast %cst_60 : f32 to vector<6x32xf32>
    %112 = arith.addf %110, %111 : vector<6x32xf32>
    %113 = arith.mulf %109, %112 : vector<6x32xf32>
    %114 = tpu.reciprocal %113 {approx = true} : vector<6x32xf32> -> vector<6x32xf32>
    %115 = arith.mulf %106, %114 : vector<6x32xf32>
    %c0_61 = arith.constant 0 : index
    %c0_62 = arith.constant 0 : index
    %116 = vector.load %arg5[%c0_61, %c0_62] : memref<1x32xf32, #tpu.memory_space<vmem>>, vector<1x32xf32>
    %117 = vector.broadcast %116 : vector<1x32xf32> to vector<6x32xf32>
    %118 = arith.mulf %115, %117 : vector<6x32xf32>
    %cst_63 = arith.constant dense<0.000000e+00> : vector<32xf32>
    %119 = vector.multi_reduction <add>, %118, %cst_63 [0] : vector<6x32xf32> to vector<32xf32>
    %120 = vector.shape_cast %119 : vector<32xf32> to vector<1x32xf32>
    %c0_64 = arith.constant 0 : index
    %c0_65 = arith.constant 0 : index
    %c0_66 = arith.constant 0 : index
    %121 = vector.load %arg6[%c0_64, %c0_65, %c0_66] : memref<1x1x32xf32, #tpu.memory_space<vmem>>, vector<1x1x32xf32>
    %122 = vector.shape_cast %121 : vector<1x1x32xf32> to vector<1x32xf32>
    %123 = vector.shape_cast %120 : vector<1x32xf32> to vector<1x1x32xf32>
    tpu.vector_store %arg6[%c0_64, %c0_65, %c0_66], %123 {strides = array<i32>} : memref<1x1x32xf32, #tpu.memory_space<vmem>>, vector<1x1x32xf32>,
    return
  }
  func.func @transform_0(%arg0: i32) -> (i32, i32, i32) {
    %c0_i32 = arith.constant 0 : i32
    %c0_i32_0 = arith.constant 0 : i32
    %c0_i32_1 = arith.constant 0 : i32
    return %arg0, %c0_i32, %c0_i32_0 : i32, i32, i32
  }
  func.func @transform_1(%arg0: i32) -> (i32, i32, i32) {
    %c0_i32 = arith.constant 0 : i32
    %c0_i32_0 = arith.constant 0 : i32
    %c0_i32_1 = arith.constant 0 : i32
    return %arg0, %c0_i32, %c0_i32_0 : i32, i32, i32
  }
  func.func @transform_2(%arg0: i32) -> (i32, i32) {
    %c0_i32 = arith.constant 0 : i32
    %c0_i32_0 = arith.constant 0 : i32
    %c0_i32_1 = arith.constant 0 : i32
    return %c0_i32, %c0_i32_0 : i32, i32
  }
  func.func @transform_3(%arg0: i32) -> (i32, i32) {
    %c0_i32 = arith.constant 0 : i32
    %c0_i32_0 = arith.constant 0 : i32
    %c0_i32_1 = arith.constant 0 : i32
    return %c0_i32, %c0_i32_0 : i32, i32
  }
  func.func @transform_4(%arg0: i32) -> (i32, i32) {
    %c0_i32 = arith.constant 0 : i32
    %c0_i32_0 = arith.constant 0 : i32
    %c0_i32_1 = arith.constant 0 : i32
    return %c0_i32, %c0_i32_0 : i32, i32
  }
  func.func @transform_5(%arg0: i32) -> (i32, i32, i32) {
    %c0_i32 = arith.constant 0 : i32
    %c0_i32_0 = arith.constant 0 : i32
    %c0_i32_1 = arith.constant 0 : i32
    return %arg0, %c0_i32, %c0_i32_0 : i32, i32, i32
  }
}

</mosaic_0001>

<llo_original>
// kernel: tpu_custom_call.1
$region0: #{tpu_custom_call.1}
  #allocation0 [shape = 'u32[]', space=smem, size = 0x4, offset = 0x4, fixed_abs, tag = 'smem constant byte address 0x4 - core index']
  #allocation1 [shape = 'u32[72,128]{1,0:T(1,128)}', space=vmem, size = 0x9000, scoped, tag = 'internal scratch']
  #allocation2 [shape = 'f32[6,34]{1,0:T(8,128)}', space=vmem, size = 0x1000, scoped, tag = 'scratch operand']
  %s0 = inlined_call_operand.hbm [shape: f32[2,16,32], index: 0, kind: input, shape index: {}]
  %s1 = inlined_call_operand.hbm [shape: f32[2,16,32], index: 1, kind: input, shape index: {}]
  %s2 = inlined_call_operand.hbm [shape: f32[6,16], index: 2, kind: input, shape index: {}]
  %s3 = inlined_call_operand.hbm [shape: f32[3,32], index: 3, kind: input, shape index: {}]
  %s4 = inlined_call_operand.vmem [shape: f32[1,32], index: 4, kind: input, shape index: {}]
  %s5 = inlined_call_operand.hbm [shape: f32[2,1,32], index: 5, kind: output, shape index: {}]
  %s6 = sld [smem:[#allocation0]]
  $region69: #{tpu_custom_call.1} parent=0
    _
  %s8 = ssub.s32 1, %s6
  %s9 = scalar_select 0, %s8, %s6
  $region1: #{tpu_custom_call.1} parent=0
    #allocation3 [shape = 'u8[16384]{0}', space=vmem, size = 0x4000, scoped, tag = 'input window, operand 0']
    #allocation4 [shape = 's32[2]{0}', space=sflag, size = 0x8, scoped, tag = 'scoped memory for tpu_custom_call.1']
    #allocation5 [shape = 's32[2]{0}', space=sflag, size = 0x8, scoped, tag = 'scoped memory for tpu_custom_call.1']
    #allocation6 [shape = 'u8[16384]{0}', space=vmem, size = 0x4000, scoped, tag = 'input window, operand 1']
    #allocation7 [shape = 's32[2]{0}', space=sflag, size = 0x8, scoped, tag = 'scoped memory for tpu_custom_call.1']
    #allocation8 [shape = 'u8[4096]{0}', space=vmem, size = 0x1000, scoped, tag = 'input window, operand 2, single buffered']
    #allocation9 [shape = 'u8[2048]{0}', space=vmem, size = 0x800, scoped, tag = 'input window, operand 3, single buffered']
    #allocation10 [shape = 's32[1]{0}', space=sflag, size = 0x4, scoped, tag = 'scoped memory for tpu_custom_call.1']
    #allocation11 [shape = 'u8[1024]{0}', space=vmem, size = 0x400, scoped, tag = 'output window, operand 0']
    %10 = vsyncpa [#allocation4], 0
    %s11 = scalar_lea.sflag [#allocation4], 1
    %12 = vsyncpa %s11, 0
    %13 = vsyncpa [#allocation7], 0
    %s14 = scalar_lea.sflag [#allocation7], 1
    %15 = vsyncpa %s14, 0
    %16 = vsyncpa [#allocation10], 0
    %17 = vsyncpa [#allocation5], 0
    %s18 = scalar_lea.sflag [#allocation5], 1
    %19 = vsyncpa %s18, 0
    loop: start=0, step=1, limit=4
    $region2: #{tpu_custom_call.1} parent=1 // loop_pre_header
      _
    $region3: #{tpu_custom_call.1} parent=1 // loop_header
      %s21 = sphi 0, %s25
      %p22 = scmp.ge.s32.totalorder %s21, 4
      %s31 = sphi 0, %s33
      %s34 = sphi 0, %s31
      %s35 = sphi 0, %s34
      %s51 = sphi 0, %s35
      %s57 = sphi 0, %s59
      %s60 = sphi 0, %s57
      %s61 = sphi 0, %s60
      %s77 = sphi 0, %s61
      %s81 = sphi 0, %s81
      %s83 = sphi 0, %s81
      %s84 = sphi 0, %s83
      %s98 = sphi 0, %s84
      %s102 = sphi 0, %s102
      %s104 = sphi 0, %s102
      %s105 = sphi 0, %s104
      %s119 = sphi 0, %s105
      %s123 = sphi 0, %s123
      %s125 = sphi 0, %s123
      %s126 = sphi 0, %s125
      %s140 = sphi 0, %s126
      %s146 = sphi 0, %s148
      %s149 = sphi 0, %s146
      %s150 = sphi 0, %s149
      %s166 = sphi 0, %s150
    $region4: #{tpu_custom_call.1} parent=1 // loop_header_branch
      %24 = sbr.rel (%p22) target = $region8
    $region5: #{tpu_custom_call.1} parent=1 // loop_body
      %s26 = ssub.s32 %s21, 1
      %s27 = ssub.s32 %s21, 2
      %s28 = sadd.s32 %s21, 1
      %s29 = ssub.s32 %s21, %s28
      %p30 = scmp.eq.s32.totalorder %s29, 0
      %s32 = sadd.s32 %s31, 1
      %s33 = scalar_select %p30, %s31, %s32
      %p36 = pneg %p30
      %p37 = scmp.eq.s32.totalorder %s21, 1
      %p38 = por %p36, %p37
      %p39 = scmp.ne.s32.totalorder %s31, %s34
      %p40 = scmp.eq.s32.totalorder %s21, 0
      %p41 = por %p39, %p40
      %p42 = scmp.ne.s32.totalorder %s31, %s34
      %p43 = scmp.eq.s32.totalorder %s26, 1
      %p44 = por %p42, %p43
      %p45 = scmp.ne.s32.totalorder %s34, %s35
      %p46 = scmp.eq.s32.totalorder %s26, 0
      %p47 = por %p45, %p46
      %p48 = scmp.ne.s32.totalorder %s34, %s35
      %p49 = scmp.eq.s32.totalorder %s27, 1
      %p50 = por %p48, %p49
      %p52 = scmp.ne.s32.totalorder %s35, %s51
      %p53 = scmp.eq.s32.totalorder %s27, 0
      %p54 = por %p52, %p53
      %s55 = ssub.s32 %s21, %s28
      %p56 = scmp.eq.s32.totalorder %s55, 0
      %s58 = sadd.s32 %s57, 1
      %s59 = scalar_select %p56, %s57, %s58
      %p62 = pneg %p56
      %p63 = scmp.eq.s32.totalorder %s21, 1
      %p64 = por %p62, %p63
      %p65 = scmp.ne.s32.totalorder %s57, %s60
      %p66 = scmp.eq.s32.totalorder %s21, 0
      %p67 = por %p65, %p66
      %p68 = scmp.ne.s32.totalorder %s57, %s60
      %p69 = scmp.eq.s32.totalorder %s26, 1
      %p70 = por %p68, %p69
      %p71 = scmp.ne.s32.totalorder %s60, %s61
      %p72 = scmp.eq.s32.totalorder %s26, 0
      %p73 = por %p71, %p72
      %p74 = scmp.ne.s32.totalorder %s60, %s61
      %p75 = scmp.eq.s32.totalorder %s27, 1
      %p76 = por %p74, %p75
      %p78 = scmp.ne.s32.totalorder %s61, %s77
      %p79 = scmp.eq.s32.totalorder %s27, 0
      %p80 = por %p78, %p79
      %s82 = sadd.s32 %s81, 1
      %p85 = scmp.eq.s32.totalorder %s21, 1
      %p86 = scmp.ne.s32.totalorder %s81, %s83
      %p87 = scmp.eq.s32.totalorder %s21, 0
      %p88 = por %p86, %p87
      %p89 = scmp.ne.s32.totalorder %s81, %s83
      %p90 = scmp.eq.s32.totalorder %s26, 1
      %p91 = por %p89, %p90
      %p92 = scmp.ne.s32.totalorder %s83, %s84
      %p93 = scmp.eq.s32.totalorder %s26, 0
      %p94 = por %p92, %p93
      %p95 = scmp.ne.s32.totalorder %s83, %s84
      %p96 = scmp.eq.s32.totalorder %s27, 1
      %p97 = por %p95, %p96
      %p99 = scmp.ne.s32.totalorder %s84, %s98
      %p100 = scmp.eq.s32.totalorder %s27, 0
      %p101 = por %p99, %p100
      %s103 = sadd.s32 %s102, 1
      %p106 = scmp.eq.s32.totalorder %s21, 1
      %p107 = scmp.ne.s32.totalorder %s102, %s104
      %p108 = scmp.eq.s32.totalorder %s21, 0
      %p109 = por %p107, %p108
      %p110 = scmp.ne.s32.totalorder %s102, %s104
      %p111 = scmp.eq.s32.totalorder %s26, 1
      %p112 = por %p110, %p111
      %p113 = scmp.ne.s32.totalorder %s104, %s105
      %p114 = scmp.eq.s32.totalorder %s26, 0
      %p115 = por %p113, %p114
      %p116 = scmp.ne.s32.totalorder %s104, %s105
      %p117 = scmp.eq.s32.totalorder %s27, 1
      %p118 = por %p116, %p117
      %p120 = scmp.ne.s32.totalorder %s105, %s119
      %p121 = scmp.eq.s32.totalorder %s27, 0
      %p122 = por %p120, %p121
      %s124 = sadd.s32 %s123, 1
      %p127 = scmp.eq.s32.totalorder %s21, 1
      %p128 = scmp.ne.s32.totalorder %s123, %s125
      %p129 = scmp.eq.s32.totalorder %s21, 0
      %p130 = por %p128, %p129
      %p131 = scmp.ne.s32.totalorder %s123, %s125
      %p132 = scmp.eq.s32.totalorder %s26, 1
      %p133 = por %p131, %p132
      %p134 = scmp.ne.s32.totalorder %s125, %s126
      %p135 = scmp.eq.s32.totalorder %s26, 0
      %p136 = por %p134, %p135
      %p137 = scmp.ne.s32.totalorder %s125, %s126
      %p138 = scmp.eq.s32.totalorder %s27, 1
      %p139 = por %p137, %p138
      %p141 = scmp.ne.s32.totalorder %s126, %s140
      %p142 = scmp.eq.s32.totalorder %s27, 0
      %p143 = por %p141, %p142
      %s144 = ssub.s32 %s21, %s28
      %p145 = scmp.eq.s32.totalorder %s144, 0
      %s147 = sadd.s32 %s146, 1
      %s148 = scalar_select %p145, %s146, %s147
      %p151 = pneg %p145
      %p152 = scmp.eq.s32.totalorder %s21, 1
      %p153 = por %p151, %p152
      %p154 = scmp.ne.s32.totalorder %s146, %s149
      %p155 = scmp.eq.s32.totalorder %s21, 0
      %p156 = por %p154, %p155
      %p157 = scmp.ne.s32.totalorder %s146, %s149
      %p158 = scmp.eq.s32.totalorder %s26, 1
      %p159 = por %p157, %p158
      %p160 = scmp.ne.s32.totalorder %s149, %s150
      %p161 = scmp.eq.s32.totalorder %s26, 0
      %p162 = por %p160, %p161
      %p163 = scmp.ne.s32.totalorder %s149, %s150
      %p164 = scmp.eq.s32.totalorder %s27, 1
      %p165 = por %p163, %p164
      %p167 = scmp.ne.s32.totalorder %s150, %s166
      %p168 = scmp.eq.s32.totalorder %s27, 0
      %p169 = por %p167, %p168
      %p170 = scmp.le.s32.totalorder 1, %s21
      %p171 = scmp.lt.s32.totalorder %s21, 3
      %p172 = pnand %p170, %p171
      %p173 = pneg %p172
      // Predicated region
      $region9: #{tpu_custom_call.1} parent=5 // pred_check
        _
      $region10: #{tpu_custom_call.1} parent=5 // pred_check_branch
        %175 = sbr.rel (%p172) target = $region12
      $region11: #{tpu_custom_call.1} parent=5 // pred_region
        %s176 = ssub.s32 %s21, 1
        // Predicated region
        $region13: #{tpu_custom_call.1} parent=11 // pred_check
          %p177 = pneg %p94
        $region14: #{tpu_custom_call.1} parent=11 // pred_check_branch
          %179 = sbr.rel (%p177) target = $region16
        $region15: #{tpu_custom_call.1} parent=11 // pred_region
          %181 = vsyncadd [#allocation7], 0
          %s183 = sshll.u32 %s2, 4
          %s184 = int_to_ptr.hbm [resolvable:$true] %s183
          %s185 = sshll.u32 [#allocation8], 4
          %s186 = int_to_ptr.vmem [resolvable:$true] %s185
          %188 = dma.hbm_to_vmem [thread:$0]  %s184, 128, %s186, [#allocation7]
        $region16: #{tpu_custom_call.1} parent=11 // pred_fallthru
          _
        // Predicated region
        $region17: #{tpu_custom_call.1} parent=11 // pred_check
          %p189 = pneg %p115
        $region18: #{tpu_custom_call.1} parent=11 // pred_check_branch
          %191 = sbr.rel (%p189) target = $region20
        $region19: #{tpu_custom_call.1} parent=11 // pred_region
          %193 = vsyncadd [#allocation10], 0
          %s195 = sshll.u32 %s3, 4
          %s196 = int_to_ptr.hbm [resolvable:$true] %s195
          %s197 = sshll.u32 [#allocation9], 4
          %s198 = int_to_ptr.vmem [resolvable:$true] %s197
          %200 = dma.hbm_to_vmem [thread:$0]  %s196, 64, %s198, [#allocation10]
        $region20: #{tpu_custom_call.1} parent=11 // pred_fallthru
          _
        // Predicated region
        $region21: #{tpu_custom_call.1} parent=11 // pred_check
          %p201 = pneg %p136
        $region22: #{tpu_custom_call.1} parent=11 // pred_check_branch
          %203 = sbr.rel (%p201) target = $region24
        $region23: #{tpu_custom_call.1} parent=11 // pred_region
          _
        $region24: #{tpu_custom_call.1} parent=11 // pred_fallthru
          _
      $region12: #{tpu_custom_call.1} parent=5 // pred_fallthru
        _
      %p204 = scmp.lt.s32.totalorder %s21, 2
      // Predicated region
      $region25: #{tpu_custom_call.1} parent=5 // pred_check
        %p205 = pneg %p204
      $region26: #{tpu_custom_call.1} parent=5 // pred_check_branch
        %207 = sbr.rel (%p205) target = $region28
      $region27: #{tpu_custom_call.1} parent=5 // pred_region
        // Predicated region
        $region29: #{tpu_custom_call.1} parent=27 // pred_check
          %p208 = pneg %p41
        $region30: #{tpu_custom_call.1} parent=27 // pred_check_branch
          %210 = sbr.rel (%p208) target = $region32
        $region31: #{tpu_custom_call.1} parent=27 // pred_region
          %s211 = sand.u32 %s31, 1
          %s212 = scalar_lea.sflag [#allocation4], %s211
          %s213 = sand.u32 %s31, 1
          %s214 = smul.addr %s213, 16
          %s215 = scalar_lea.vmem [#allocation3], %s214
          %217 = vsyncadd %s212, 0
          %s218 = smul.addr %s21, 2
          %s219 = smul.addr %s218, 8
          %s220 = scalar_lea.hbm %s0, %s219
          %s221 = sshll.u32 %s220, 4
          %s222 = int_to_ptr.hbm [resolvable:$true] %s221
          %s223 = sshll.u32 %s215, 4
          %s224 = int_to_ptr.vmem [resolvable:$true] %s223
          %229 = dma.hbm_to_vmem [thread:$0]  %s222, 256, %s224, %s212, 128, 128, 8
        $region32: #{tpu_custom_call.1} parent=27 // pred_fallthru
          _
        // Predicated region
        $region33: #{tpu_custom_call.1} parent=27 // pred_check
          %p230 = pneg %p67
        $region34: #{tpu_custom_call.1} parent=27 // pred_check_branch
          %232 = sbr.rel (%p230) target = $region36
        $region35: #{tpu_custom_call.1} parent=27 // pred_region
          %s233 = sand.u32 %s21, 1
          %s234 = scalar_lea.sflag [#allocation7], %s233
          %s235 = sand.u32 %s57, 1
          %s236 = smul.addr %s235, 16
          %s237 = scalar_lea.vmem [#allocation6], %s236
          %239 = vsyncadd %s234, 0
          %s240 = smul.addr %s21, 2
          %s241 = smul.addr %s240, 8
          %s242 = scalar_lea.hbm %s1, %s241
          %s243 = sshll.u32 %s242, 4
          %s244 = int_to_ptr.hbm [resolvable:$true] %s243
          %s245 = sshll.u32 %s237, 4
          %s246 = int_to_ptr.vmem [resolvable:$true] %s245
          %251 = dma.hbm_to_vmem [thread:$0]  %s244, 256, %s246, %s234, 128, 128, 8
        $region36: #{tpu_custom_call.1} parent=27 // pred_fallthru
          _
      $region28: #{tpu_custom_call.1} parent=5 // pred_fallthru
        _
      %p252 = scmp.le.s32.totalorder 1, %s21
      %p253 = scmp.lt.s32.totalorder %s21, 3
      %p254 = pnand %p252, %p253
      %p255 = pneg %p254
      // Predicated region
      $region37: #{tpu_custom_call.1} parent=5 // pred_check
        _
      $region38: #{tpu_custom_call.1} parent=5 // pred_check_branch
        %257 = sbr.rel (%p254) target = $region40
      $region39: #{tpu_custom_call.1} parent=5 // pred_region
        %s258 = ssub.s32 %s21, 1
        %s259 = sand.u32 %s34, 1
        %s260 = scalar_lea.sflag [#allocation4], %s259
        %s261 = sand.u32 %s34, 1
        %s262 = smul.addr %s261, 16
        %s263 = scalar_lea.vmem [#allocation3], %s262
        // Predicated region
        $region41: #{tpu_custom_call.1} parent=39 // pred_check
          %p264 = pneg %p47
        $region42: #{tpu_custom_call.1} parent=39 // pred_check_branch
          %266 = sbr.rel (%p264) target = $region44
        $region43: #{tpu_custom_call.1} parent=39 // pred_region
          %268 = dma.done %s260, 256
        $region44: #{tpu_custom_call.1} parent=39 // pred_fallthru
          _
        %s269 = sand.u32 %s26, 1
        %s270 = scalar_lea.sflag [#allocation7], %s269
        %s271 = sand.u32 %s60, 1
        %s272 = smul.addr %s271, 16
        %s273 = scalar_lea.vmem [#allocation6], %s272
        // Predicated region
        $region45: #{tpu_custom_call.1} parent=39 // pred_check
          %p274 = pneg %p73
        $region46: #{tpu_custom_call.1} parent=39 // pred_check_branch
          %276 = sbr.rel (%p274) target = $region48
        $region47: #{tpu_custom_call.1} parent=39 // pred_region
          %278 = dma.done %s270, 256
        $region48: #{tpu_custom_call.1} parent=39 // pred_fallthru
          _
        // Predicated region
        $region49: #{tpu_custom_call.1} parent=39 // pred_check
          %p279 = pneg %p94
        $region50: #{tpu_custom_call.1} parent=39 // pred_check_branch
          %281 = sbr.rel (%p279) target = $region52
        $region51: #{tpu_custom_call.1} parent=39 // pred_region
          %283 = dma.done [#allocation7], 128
        $region52: #{tpu_custom_call.1} parent=39 // pred_fallthru
          _
        // Predicated region
        $region53: #{tpu_custom_call.1} parent=39 // pred_check
          %p284 = pneg %p115
        $region54: #{tpu_custom_call.1} parent=39 // pred_check_branch
          %286 = sbr.rel (%p284) target = $region56
        $region55: #{tpu_custom_call.1} parent=39 // pred_region
          %288 = dma.done [#allocation10], 64
        $region56: #{tpu_custom_call.1} parent=39 // pred_fallthru
          _
        %s289 = sand.u32 %s34, 1
        %s290 = scalar_lea.sflag [#allocation4], %s289
        %s291 = sand.u32 %s34, 1
        %s292 = smul.addr %s291, 16
        %s293 = scalar_lea.vmem [#allocation3], %s292
        %p294 = pneg %p47
        %p295 = pneg %p44
        %s296 = sand.u32 %s26, 1
        %s297 = scalar_lea.sflag [#allocation7], %s296
        %s298 = sand.u32 %s60, 1
        %s299 = smul.addr %s298, 16
        %s300 = scalar_lea.vmem [#allocation6], %s299
        %p301 = pneg %p73
        %p302 = pneg %p70
        %p303 = pneg %p94
        %p304 = pneg %p91
        %p305 = pneg %p115
        %p306 = pneg %p112
        %p307 = pneg %p136
        %p308 = pneg %p133
        %p309 = pneg %p162
        %p310 = pneg %p159
        %s311 = sand.u32 %s149, 1
        %s312 = scalar_lea.sflag [#allocation5], %s311
        %s313 = sand.u32 %s149, 1
        %s314 = scalar_lea.vmem [#allocation11], %s313
        %v315 = vld [vmem:[%s263] sm:$0xff]
        %v316 = vld [vmem:[%s263 + $0x8] sm:$0xff]
        %v317 = vld [vmem:[%s273] sm:$0xff]
        %v318 = vld [vmem:[%s273 + $0x8] sm:$0xff]
        %v319 = vld [vmem:[#allocation8] sm:$0x3f]
        %v320 = vld [vmem:[#allocation9] sm:$0x7]
        %vm321 = vcmask 130048
        %v323 = vsel %vm321, %v319, 0
        %325 = vmatpush.msra.mxu0 0.0
        %326 = vmatpush.msra.mxu0 0.0
        %327 = vmatpush.msra.mxu0 0.0
        %328 = vmatpush.msra.mxu0 0.0
        %329 = vmatpush.msra.mxu0 0.0
        %330 = vmatpush.msra.mxu0 0.0
        %331 = vmatpush.msra.mxu0 0.0
        %332 = vmatpush.msra.mxu0 0.0
        %333 = vmatpush.msra.mxu0 0.0
        %334 = vmatpush.msra.mxu0 0.0
        %335 = vmatpush.msra.mxu0 0.0
        %336 = vmatpush.msra.mxu0 0.0
        %337 = vmatpush.msra.mxu0 0.0
        %338 = vmatpush.msra.mxu0 0.0
        %v339 = vand.u32 %v316, 4294901760
        %340 = vmatpush.msra.mxu0 %v339
        %v341 = vand.u32 %v315, 4294901760
        %342 = vmatpush.msra.mxu0 %v341
        %v343 = vand.u32 %v323, 4294901760
        %v344 = vsub.f32 %v323, %v343
        %v345 = vand.u32 %v344, 4294901760
        %v346 = vsub.f32 %v344, %v345
        %v347 = vand.u32 %v346, 4294901760
        %348 = vmatmul.f32.gmra.mxu0 %v347
        %v349 = vpop.f32.mrf.mxu0
        %v350 = vadd.f32 0.0, %v349
        %351 = vdwg.mxu0
        %352 = vmatpush.msra.mxu0 0.0
        %353 = vmatpush.msra.mxu0 0.0
        %354 = vmatpush.msra.mxu0 0.0
        %355 = vmatpush.msra.mxu0 0.0
        %356 = vmatpush.msra.mxu0 0.0
        %357 = vmatpush.msra.mxu0 0.0
        %358 = vmatpush.msra.mxu0 0.0
        %359 = vmatpush.msra.mxu0 0.0
        %360 = vmatpush.msra.mxu0 0.0
        %361 = vmatpush.msra.mxu0 0.0
        %362 = vmatpush.msra.mxu0 0.0
        %363 = vmatpush.msra.mxu0 0.0
        %364 = vmatpush.msra.mxu0 0.0
        %365 = vmatpush.msra.mxu0 0.0
        %v366 = vand.u32 %v316, 4294901760
        %v367 = vsub.f32 %v316, %v366
        %v368 = vand.u32 %v367, 4294901760
        %v369 = vsub.f32 %v367, %v368
        %v370 = vand.u32 %v369, 4294901760
        %371 = vmatpush.msra.mxu0 %v370
        %v372 = vand.u32 %v315, 4294901760
        %v373 = vsub.f32 %v315, %v372
        %v374 = vand.u32 %v373, 4294901760
        %v375 = vsub.f32 %v373, %v374
        %v376 = vand.u32 %v375, 4294901760
        %377 = vmatpush.msra.mxu0 %v376
        %v378 = vand.u32 %v323, 4294901760
        %379 = vmatmul.f32.gmra.mxu0 %v378
        %v380 = vpop.f32.mrf.mxu0
        %v381 = vadd.f32 %v350, %v380
        %382 = vdwg.mxu0
        %383 = vmatpush.msra.mxu0 0.0
        %384 = vmatpush.msra.mxu0 0.0
        %385 = vmatpush.msra.mxu0 0.0
        %386 = vmatpush.msra.mxu0 0.0
        %387 = vmatpush.msra.mxu0 0.0
        %388 = vmatpush.msra.mxu0 0.0
        %389 = vmatpush.msra.mxu0 0.0
        %390 = vmatpush.msra.mxu0 0.0
        %391 = vmatpush.msra.mxu0 0.0
        %392 = vmatpush.msra.mxu0 0.0
        %393 = vmatpush.msra.mxu0 0.0
        %394 = vmatpush.msra.mxu0 0.0
        %395 = vmatpush.msra.mxu0 0.0
        %396 = vmatpush.msra.mxu0 0.0
        %v397 = vand.u32 %v316, 4294901760
        %v398 = vsub.f32 %v316, %v397
        %399 = vmatpush.msra.mxu0 %v398
        %v400 = vand.u32 %v315, 4294901760
        %v401 = vsub.f32 %v315, %v400
        %402 = vmatpush.msra.mxu0 %v401
        %v403 = vand.u32 %v323, 4294901760
        %v404 = vsub.f32 %v323, %v403
        %405 = vmatmul.f32.gmra.mxu0 %v404
        %v406 = vpop.f32.mrf.mxu0
        %v407 = vadd.f32 %v381, %v406
        %408 = vdwg.mxu0
        %409 = vmatpush.msra.mxu0 0.0
        %410 = vmatpush.msra.mxu0 0.0
        %411 = vmatpush.msra.mxu0 0.0
        %412 = vmatpush.msra.mxu0 0.0
        %413 = vmatpush.msra.mxu0 0.0
        %414 = vmatpush.msra.mxu0 0.0
        %415 = vmatpush.msra.mxu0 0.0
        %416 = vmatpush.msra.mxu0 0.0
        %417 = vmatpush.msra.mxu0 0.0
        %418 = vmatpush.msra.mxu0 0.0
        %419 = vmatpush.msra.mxu0 0.0
        %420 = vmatpush.msra.mxu0 0.0
        %421 = vmatpush.msra.mxu0 0.0
        %422 = vmatpush.msra.mxu0 0.0
        %v423 = vand.u32 %v316, 4294901760
        %424 = vmatpush.msra.mxu0 %v423
        %v425 = vand.u32 %v315, 4294901760
        %426 = vmatpush.msra.mxu0 %v425
        %v427 = vand.u32 %v323, 4294901760
        %v428 = vsub.f32 %v323, %v427
        %v429 = vand.u32 %v428, 4294901760
        %430 = vmatmul.f32.gmra.mxu0 %v429
        %v431 = vpop.f32.mrf.mxu0
        %v432 = vadd.f32 %v407, %v431
        %433 = vdwg.mxu0
        %434 = vmatpush.msra.mxu0 0.0
        %435 = vmatpush.msra.mxu0 0.0
        %436 = vmatpush.msra.mxu0 0.0
        %437 = vmatpush.msra.mxu0 0.0
        %438 = vmatpush.msra.mxu0 0.0
        %439 = vmatpush.msra.mxu0 0.0
        %440 = vmatpush.msra.mxu0 0.0
        %441 = vmatpush.msra.mxu0 0.0
        %442 = vmatpush.msra.mxu0 0.0
        %443 = vmatpush.msra.mxu0 0.0
        %444 = vmatpush.msra.mxu0 0.0
        %445 = vmatpush.msra.mxu0 0.0
        %446 = vmatpush.msra.mxu0 0.0
        %447 = vmatpush.msra.mxu0 0.0
        %v448 = vand.u32 %v316, 4294901760
        %v449 = vsub.f32 %v316, %v448
        %v450 = vand.u32 %v449, 4294901760
        %451 = vmatpush.msra.mxu0 %v450
        %v452 = vand.u32 %v315, 4294901760
        %v453 = vsub.f32 %v315, %v452
        %v454 = vand.u32 %v453, 4294901760
        %455 = vmatpush.msra.mxu0 %v454
        %v456 = vand.u32 %v323, 4294901760
        %457 = vmatmul.f32.gmra.mxu0 %v456
        %v458 = vpop.f32.mrf.mxu0
        %v459 = vadd.f32 %v432, %v458
        %460 = vdwg.mxu0
        %461 = vmatpush.msra.mxu0 0.0
        %462 = vmatpush.msra.mxu0 0.0
        %463 = vmatpush.msra.mxu0 0.0
        %464 = vmatpush.msra.mxu0 0.0
        %465 = vmatpush.msra.mxu0 0.0
        %466 = vmatpush.msra.mxu0 0.0
        %467 = vmatpush.msra.mxu0 0.0
        %468 = vmatpush.msra.mxu0 0.0
        %469 = vmatpush.msra.mxu0 0.0
        %470 = vmatpush.msra.mxu0 0.0
        %471 = vmatpush.msra.mxu0 0.0
        %472 = vmatpush.msra.mxu0 0.0
        %473 = vmatpush.msra.mxu0 0.0
        %474 = vmatpush.msra.mxu0 0.0
        %v475 = vand.u32 %v316, 4294901760
        %476 = vmatpush.msra.mxu0 %v475
        %v477 = vand.u32 %v315, 4294901760
        %478 = vmatpush.msra.mxu0 %v477
        %v479 = vand.u32 %v323, 4294901760
        %480 = vmatmul.f32.gmra.mxu0 %v479
        %v481 = vpop.f32.mrf.mxu0
        %v482 = vadd.f32 %v459, %v481
        %483 = vdwg.mxu0
        %484 = vmatpush.msra.mxu0 0.0
        %485 = vmatpush.msra.mxu0 0.0
        %486 = vmatpush.msra.mxu0 0.0
        %487 = vmatpush.msra.mxu0 0.0
        %488 = vmatpush.msra.mxu0 0.0
        %489 = vmatpush.msra.mxu0 0.0
        %490 = vmatpush.msra.mxu0 0.0
        %491 = vmatpush.msra.mxu0 0.0
        %492 = vmatpush.msra.mxu0 0.0
        %493 = vmatpush.msra.mxu0 0.0
        %494 = vmatpush.msra.mxu0 0.0
        %495 = vmatpush.msra.mxu0 0.0
        %496 = vmatpush.msra.mxu0 0.0
        %497 = vmatpush.msra.mxu0 0.0
        %v498 = vand.u32 %v318, 4294901760
        %499 = vmatpush.msra.mxu0 %v498
        %v500 = vand.u32 %v317, 4294901760
        %501 = vmatpush.msra.mxu0 %v500
        %v502 = vand.u32 %v323, 4294901760
        %v503 = vsub.f32 %v323, %v502
        %v504 = vand.u32 %v503, 4294901760
        %v505 = vsub.f32 %v503, %v504
        %v506 = vand.u32 %v505, 4294901760
        %507 = vmatmul.f32.gmra.mxu0 %v506
        %v508 = vpop.f32.mrf.mxu0
        %v509 = vadd.f32 0.0, %v508
        %510 = vdwg.mxu0
        %511 = vmatpush.msra.mxu0 0.0
        %512 = vmatpush.msra.mxu0 0.0
        %513 = vmatpush.msra.mxu0 0.0
        %514 = vmatpush.msra.mxu0 0.0
        %515 = vmatpush.msra.mxu0 0.0
        %516 = vmatpush.msra.mxu0 0.0
        %517 = vmatpush.msra.mxu0 0.0
        %518 = vmatpush.msra.mxu0 0.0
        %519 = vmatpush.msra.mxu0 0.0
        %520 = vmatpush.msra.mxu0 0.0
        %521 = vmatpush.msra.mxu0 0.0
        %522 = vmatpush.msra.mxu0 0.0
        %523 = vmatpush.msra.mxu0 0.0
        %524 = vmatpush.msra.mxu0 0.0
        %v525 = vand.u32 %v318, 4294901760
        %v526 = vsub.f32 %v318, %v525
        %v527 = vand.u32 %v526, 4294901760
        %v528 = vsub.f32 %v526, %v527
        %v529 = vand.u32 %v528, 4294901760
        %530 = vmatpush.msra.mxu0 %v529
        %v531 = vand.u32 %v317, 4294901760
        %v532 = vsub.f32 %v317, %v531
        %v533 = vand.u32 %v532, 4294901760
        %v534 = vsub.f32 %v532, %v533
        %v535 = vand.u32 %v534, 4294901760
        %536 = vmatpush.msra.mxu0 %v535
        %v537 = vand.u32 %v323, 4294901760
        %538 = vmatmul.f32.gmra.mxu0 %v537
        %v539 = vpop.f32.mrf.mxu0
        %v540 = vadd.f32 %v509, %v539
        %541 = vdwg.mxu0
        %542 = vmatpush.msra.mxu0 0.0
        %543 = vmatpush.msra.mxu0 0.0
        %544 = vmatpush.msra.mxu0 0.0
        %545 = vmatpush.msra.mxu0 0.0
        %546 = vmatpush.msra.mxu0 0.0
        %547 = vmatpush.msra.mxu0 0.0
        %548 = vmatpush.msra.mxu0 0.0
        %549 = vmatpush.msra.mxu0 0.0
        %550 = vmatpush.msra.mxu0 0.0
        %551 = vmatpush.msra.mxu0 0.0
        %552 = vmatpush.msra.mxu0 0.0
        %553 = vmatpush.msra.mxu0 0.0
        %554 = vmatpush.msra.mxu0 0.0
        %555 = vmatpush.msra.mxu0 0.0
        %v556 = vand.u32 %v318, 4294901760
        %v557 = vsub.f32 %v318, %v556
        %558 = vmatpush.msra.mxu0 %v557
        %v559 = vand.u32 %v317, 4294901760
        %v560 = vsub.f32 %v317, %v559
        %561 = vmatpush.msra.mxu0 %v560
        %v562 = vand.u32 %v323, 4294901760
        %v563 = vsub.f32 %v323, %v562
        %564 = vmatmul.f32.gmra.mxu0 %v563
        %v565 = vpop.f32.mrf.mxu0
        %v566 = vadd.f32 %v540, %v565
        %567 = vdwg.mxu0
        %568 = vmatpush.msra.mxu0 0.0
        %569 = vmatpush.msra.mxu0 0.0
        %570 = vmatpush.msra.mxu0 0.0
        %571 = vmatpush.msra.mxu0 0.0
        %572 = vmatpush.msra.mxu0 0.0
        %573 = vmatpush.msra.mxu0 0.0
        %574 = vmatpush.msra.mxu0 0.0
        %575 = vmatpush.msra.mxu0 0.0
        %576 = vmatpush.msra.mxu0 0.0
        %577 = vmatpush.msra.mxu0 0.0
        %578 = vmatpush.msra.mxu0 0.0
        %579 = vmatpush.msra.mxu0 0.0
        %580 = vmatpush.msra.mxu0 0.0
        %581 = vmatpush.msra.mxu0 0.0
        %v582 = vand.u32 %v318, 4294901760
        %583 = vmatpush.msra.mxu0 %v582
        %v584 = vand.u32 %v317, 4294901760
        %585 = vmatpush.msra.mxu0 %v584
        %v586 = vand.u32 %v323, 4294901760
        %v587 = vsub.f32 %v323, %v586
        %v588 = vand.u32 %v587, 4294901760
        %589 = vmatmul.f32.gmra.mxu0 %v588
        %v590 = vpop.f32.mrf.mxu0
        %v591 = vadd.f32 %v566, %v590
        %592 = vdwg.mxu0
        %593 = vmatpush.msra.mxu0 0.0
        %594 = vmatpush.msra.mxu0 0.0
        %595 = vmatpush.msra.mxu0 0.0
        %596 = vmatpush.msra.mxu0 0.0
        %597 = vmatpush.msra.mxu0 0.0
        %598 = vmatpush.msra.mxu0 0.0
        %599 = vmatpush.msra.mxu0 0.0
        %600 = vmatpush.msra.mxu0 0.0
        %601 = vmatpush.msra.mxu0 0.0
        %602 = vmatpush.msra.mxu0 0.0
        %603 = vmatpush.msra.mxu0 0.0
        %604 = vmatpush.msra.mxu0 0.0
        %605 = vmatpush.msra.mxu0 0.0
        %606 = vmatpush.msra.mxu0 0.0
        %v607 = vand.u32 %v318, 4294901760
        %v608 = vsub.f32 %v318, %v607
        %v609 = vand.u32 %v608, 4294901760
        %610 = vmatpush.msra.mxu0 %v609
        %v611 = vand.u32 %v317, 4294901760
        %v612 = vsub.f32 %v317, %v611
        %v613 = vand.u32 %v612, 4294901760
        %614 = vmatpush.msra.mxu0 %v613
        %v615 = vand.u32 %v323, 4294901760
        %616 = vmatmul.f32.gmra.mxu0 %v615
        %v617 = vpop.f32.mrf.mxu0
        %v618 = vadd.f32 %v591, %v617
        %619 = vdwg.mxu0
        %620 = vmatpush.msra.mxu0 0.0
        %621 = vmatpush.msra.mxu0 0.0
        %622 = vmatpush.msra.mxu0 0.0
        %623 = vmatpush.msra.mxu0 0.0
        %624 = vmatpush.msra.mxu0 0.0
        %625 = vmatpush.msra.mxu0 0.0
        %626 = vmatpush.msra.mxu0 0.0
        %627 = vmatpush.msra.mxu0 0.0
        %628 = vmatpush.msra.mxu0 0.0
        %629 = vmatpush.msra.mxu0 0.0
        %630 = vmatpush.msra.mxu0 0.0
        %631 = vmatpush.msra.mxu0 0.0
        %632 = vmatpush.msra.mxu0 0.0
        %633 = vmatpush.msra.mxu0 0.0
        %v634 = vand.u32 %v318, 4294901760
        %635 = vmatpush.msra.mxu0 %v634
        %v636 = vand.u32 %v317, 4294901760
        %637 = vmatpush.msra.mxu0 %v636
        %v638 = vand.u32 %v323, 4294901760
        %639 = vmatmul.f32.gmra.mxu0 %v638
        %v640 = vpop.f32.mrf.mxu0
        %v641 = vadd.f32 %v618, %v640
        %642 = vdwg.mxu0
        %v643 = vmul.f32 %v315, %v315
        %v644 = vmul.f32 %v316, %v316
        %645 = vmatpush.msra.mxu0 0.0
        %646 = vmatpush.msra.mxu0 0.0
        %647 = vmatpush.msra.mxu0 0.0
        %648 = vmatpush.msra.mxu0 0.0
        %649 = vmatpush.msra.mxu0 0.0
        %650 = vmatpush.msra.mxu0 0.0
        %651 = vmatpush.msra.mxu0 0.0
        %652 = vmatpush.msra.mxu0 0.0
        %653 = vmatpush.msra.mxu0 0.0
        %654 = vmatpush.msra.mxu0 0.0
        %655 = vmatpush.msra.mxu0 0.0
        %656 = vmatpush.msra.mxu0 0.0
        %657 = vmatpush.msra.mxu0 0.0
        %658 = vmatpush.msra.mxu0 0.0
        %v659 = vand.u32 %v644, 4294901760
        %660 = vmatpush.msra.mxu0 %v659
        %v661 = vand.u32 %v643, 4294901760
        %662 = vmatpush.msra.mxu0 %v661
        %v663 = vand.u32 %v323, 4294901760
        %v664 = vsub.f32 %v323, %v663
        %v665 = vand.u32 %v664, 4294901760
        %v666 = vsub.f32 %v664, %v665
        %v667 = vand.u32 %v666, 4294901760
        %668 = vmatmul.f32.gmra.mxu0 %v667
        %v669 = vpop.f32.mrf.mxu0
        %v670 = vadd.f32 0.0, %v669
        %671 = vdwg.mxu0
        %672 = vmatpush.msra.mxu0 0.0
        %673 = vmatpush.msra.mxu0 0.0
        %674 = vmatpush.msra.mxu0 0.0
        %675 = vmatpush.msra.mxu0 0.0
        %676 = vmatpush.msra.mxu0 0.0
        %677 = vmatpush.msra.mxu0 0.0
        %678 = vmatpush.msra.mxu0 0.0
        %679 = vmatpush.msra.mxu0 0.0
        %680 = vmatpush.msra.mxu0 0.0
        %681 = vmatpush.msra.mxu0 0.0
        %682 = vmatpush.msra.mxu0 0.0
        %683 = vmatpush.msra.mxu0 0.0
        %684 = vmatpush.msra.mxu0 0.0
        %685 = vmatpush.msra.mxu0 0.0
        %v686 = vand.u32 %v644, 4294901760
        %v687 = vsub.f32 %v644, %v686
        %v688 = vand.u32 %v687, 4294901760
        %v689 = vsub.f32 %v687, %v688
        %v690 = vand.u32 %v689, 4294901760
        %691 = vmatpush.msra.mxu0 %v690
        %v692 = vand.u32 %v643, 4294901760
        %v693 = vsub.f32 %v643, %v692
        %v694 = vand.u32 %v693, 4294901760
        %v695 = vsub.f32 %v693, %v694
        %v696 = vand.u32 %v695, 4294901760
        %697 = vmatpush.msra.mxu0 %v696
        %v698 = vand.u32 %v323, 4294901760
        %699 = vmatmul.f32.gmra.mxu0 %v698
        %v700 = vpop.f32.mrf.mxu0
        %v701 = vadd.f32 %v670, %v700
        %702 = vdwg.mxu0
        %703 = vmatpush.msra.mxu0 0.0
        %704 = vmatpush.msra.mxu0 0.0
        %705 = vmatpush.msra.mxu0 0.0
        %706 = vmatpush.msra.mxu0 0.0
        %707 = vmatpush.msra.mxu0 0.0
        %708 = vmatpush.msra.mxu0 0.0
        %709 = vmatpush.msra.mxu0 0.0
        %710 = vmatpush.msra.mxu0 0.0
        %711 = vmatpush.msra.mxu0 0.0
        %712 = vmatpush.msra.mxu0 0.0
        %713 = vmatpush.msra.mxu0 0.0
        %714 = vmatpush.msra.mxu0 0.0
        %715 = vmatpush.msra.mxu0 0.0
        %716 = vmatpush.msra.mxu0 0.0
        %v717 = vand.u32 %v644, 4294901760
        %v718 = vsub.f32 %v644, %v717
        %719 = vmatpush.msra.mxu0 %v718
        %v720 = vand.u32 %v643, 4294901760
        %v721 = vsub.f32 %v643, %v720
        %722 = vmatpush.msra.mxu0 %v721
        %v723 = vand.u32 %v323, 4294901760
        %v724 = vsub.f32 %v323, %v723
        %725 = vmatmul.f32.gmra.mxu0 %v724
        %v726 = vpop.f32.mrf.mxu0
        %v727 = vadd.f32 %v701, %v726
        %728 = vdwg.mxu0
        %729 = vmatpush.msra.mxu0 0.0
        %730 = vmatpush.msra.mxu0 0.0
        %731 = vmatpush.msra.mxu0 0.0
        %732 = vmatpush.msra.mxu0 0.0
        %733 = vmatpush.msra.mxu0 0.0
        %734 = vmatpush.msra.mxu0 0.0
        %735 = vmatpush.msra.mxu0 0.0
        %736 = vmatpush.msra.mxu0 0.0
        %737 = vmatpush.msra.mxu0 0.0
        %738 = vmatpush.msra.mxu0 0.0
        %739 = vmatpush.msra.mxu0 0.0
        %740 = vmatpush.msra.mxu0 0.0
        %741 = vmatpush.msra.mxu0 0.0
        %742 = vmatpush.msra.mxu0 0.0
        %v743 = vand.u32 %v644, 4294901760
        %744 = vmatpush.msra.mxu0 %v743
        %v745 = vand.u32 %v643, 4294901760
        %746 = vmatpush.msra.mxu0 %v745
        %v747 = vand.u32 %v323, 4294901760
        %v748 = vsub.f32 %v323, %v747
        %v749 = vand.u32 %v748, 4294901760
        %750 = vmatmul.f32.gmra.mxu0 %v749
        %v751 = vpop.f32.mrf.mxu0
        %v752 = vadd.f32 %v727, %v751
        %753 = vdwg.mxu0
        %754 = vmatpush.msra.mxu0 0.0
        %755 = vmatpush.msra.mxu0 0.0
        %756 = vmatpush.msra.mxu0 0.0
        %757 = vmatpush.msra.mxu0 0.0
        %758 = vmatpush.msra.mxu0 0.0
        %759 = vmatpush.msra.mxu0 0.0
        %760 = vmatpush.msra.mxu0 0.0
        %761 = vmatpush.msra.mxu0 0.0
        %762 = vmatpush.msra.mxu0 0.0
        %763 = vmatpush.msra.mxu0 0.0
        %764 = vmatpush.msra.mxu0 0.0
        %765 = vmatpush.msra.mxu0 0.0
        %766 = vmatpush.msra.mxu0 0.0
        %767 = vmatpush.msra.mxu0 0.0
        %v768 = vand.u32 %v644, 4294901760
        %v769 = vsub.f32 %v644, %v768
        %v770 = vand.u32 %v769, 4294901760
        %771 = vmatpush.msra.mxu0 %v770
        %v772 = vand.u32 %v643, 4294901760
        %v773 = vsub.f32 %v643, %v772
        %v774 = vand.u32 %v773, 4294901760
        %775 = vmatpush.msra.mxu0 %v774
        %v776 = vand.u32 %v323, 4294901760
        %777 = vmatmul.f32.gmra.mxu0 %v776
        %v778 = vpop.f32.mrf.mxu0
        %v779 = vadd.f32 %v752, %v778
        %780 = vdwg.mxu0
        %781 = vmatpush.msra.mxu0 0.0
        %782 = vmatpush.msra.mxu0 0.0
        %783 = vmatpush.msra.mxu0 0.0
        %784 = vmatpush.msra.mxu0 0.0
        %785 = vmatpush.msra.mxu0 0.0
        %786 = vmatpush.msra.mxu0 0.0
        %787 = vmatpush.msra.mxu0 0.0
        %788 = vmatpush.msra.mxu0 0.0
        %789 = vmatpush.msra.mxu0 0.0
        %790 = vmatpush.msra.mxu0 0.0
        %791 = vmatpush.msra.mxu0 0.0
        %792 = vmatpush.msra.mxu0 0.0
        %793 = vmatpush.msra.mxu0 0.0
        %794 = vmatpush.msra.mxu0 0.0
        %v795 = vand.u32 %v644, 4294901760
        %796 = vmatpush.msra.mxu0 %v795
        %v797 = vand.u32 %v643, 4294901760
        %798 = vmatpush.msra.mxu0 %v797
        %v799 = vand.u32 %v323, 4294901760
        %800 = vmatmul.f32.gmra.mxu0 %v799
        %v801 = vpop.f32.mrf.mxu0
        %v802 = vadd.f32 %v779, %v801
        %803 = vdwg.mxu0
        %v804 = vmul.f32 %v317, %v317
        %v805 = vmul.f32 %v318, %v318
        %806 = vmatpush.msra.mxu0 0.0
        %807 = vmatpush.msra.mxu0 0.0
        %808 = vmatpush.msra.mxu0 0.0
        %809 = vmatpush.msra.mxu0 0.0
        %810 = vmatpush.msra.mxu0 0.0
        %811 = vmatpush.msra.mxu0 0.0
        %812 = vmatpush.msra.mxu0 0.0
        %813 = vmatpush.msra.mxu0 0.0
        %814 = vmatpush.msra.mxu0 0.0
        %815 = vmatpush.msra.mxu0 0.0
        %816 = vmatpush.msra.mxu0 0.0
        %817 = vmatpush.msra.mxu0 0.0
        %818 = vmatpush.msra.mxu0 0.0
        %819 = vmatpush.msra.mxu0 0.0
        %v820 = vand.u32 %v805, 4294901760
        %821 = vmatpush.msra.mxu0 %v820
        %v822 = vand.u32 %v804, 4294901760
        %823 = vmatpush.msra.mxu0 %v822
        %v824 = vand.u32 %v323, 4294901760
        %v825 = vsub.f32 %v323, %v824
        %v826 = vand.u32 %v825, 4294901760
        %v827 = vsub.f32 %v825, %v826
        %v828 = vand.u32 %v827, 4294901760
        %829 = vmatmul.f32.gmra.mxu0 %v828
        %v830 = vpop.f32.mrf.mxu0
        %v831 = vadd.f32 0.0, %v830
        %832 = vdwg.mxu0
        %833 = vmatpush.msra.mxu0 0.0
        %834 = vmatpush.msra.mxu0 0.0
        %835 = vmatpush.msra.mxu0 0.0
        %836 = vmatpush.msra.mxu0 0.0
        %837 = vmatpush.msra.mxu0 0.0
        %838 = vmatpush.msra.mxu0 0.0
        %839 = vmatpush.msra.mxu0 0.0
        %840 = vmatpush.msra.mxu0 0.0
        %841 = vmatpush.msra.mxu0 0.0
        %842 = vmatpush.msra.mxu0 0.0
        %843 = vmatpush.msra.mxu0 0.0
        %844 = vmatpush.msra.mxu0 0.0
        %845 = vmatpush.msra.mxu0 0.0
        %846 = vmatpush.msra.mxu0 0.0
        %v847 = vand.u32 %v805, 4294901760
        %v848 = vsub.f32 %v805, %v847
        %v849 = vand.u32 %v848, 4294901760
        %v850 = vsub.f32 %v848, %v849
        %v851 = vand.u32 %v850, 4294901760
        %852 = vmatpush.msra.mxu0 %v851
        %v853 = vand.u32 %v804, 4294901760
        %v854 = vsub.f32 %v804, %v853
        %v855 = vand.u32 %v854, 4294901760
        %v856 = vsub.f32 %v854, %v855
        %v857 = vand.u32 %v856, 4294901760
        %858 = vmatpush.msra.mxu0 %v857
        %v859 = vand.u32 %v323, 4294901760
        %860 = vmatmul.f32.gmra.mxu0 %v859
        %v861 = vpop.f32.mrf.mxu0
        %v862 = vadd.f32 %v831, %v861
        %863 = vdwg.mxu0
        %864 = vmatpush.msra.mxu0 0.0
        %865 = vmatpush.msra.mxu0 0.0
        %866 = vmatpush.msra.mxu0 0.0
        %867 = vmatpush.msra.mxu0 0.0
        %868 = vmatpush.msra.mxu0 0.0
        %869 = vmatpush.msra.mxu0 0.0
        %870 = vmatpush.msra.mxu0 0.0
        %871 = vmatpush.msra.mxu0 0.0
        %872 = vmatpush.msra.mxu0 0.0
        %873 = vmatpush.msra.mxu0 0.0
        %874 = vmatpush.msra.mxu0 0.0
        %875 = vmatpush.msra.mxu0 0.0
        %876 = vmatpush.msra.mxu0 0.0
        %877 = vmatpush.msra.mxu0 0.0
        %v878 = vand.u32 %v805, 4294901760
        %v879 = vsub.f32 %v805, %v878
        %880 = vmatpush.msra.mxu0 %v879
        %v881 = vand.u32 %v804, 4294901760
        %v882 = vsub.f32 %v804, %v881
        %883 = vmatpush.msra.mxu0 %v882
        %v884 = vand.u32 %v323, 4294901760
        %v885 = vsub.f32 %v323, %v884
        %886 = vmatmul.f32.gmra.mxu0 %v885
        %v887 = vpop.f32.mrf.mxu0
        %v888 = vadd.f32 %v862, %v887
        %889 = vdwg.mxu0
        %890 = vmatpush.msra.mxu0 0.0
        %891 = vmatpush.msra.mxu0 0.0
        %892 = vmatpush.msra.mxu0 0.0
        %893 = vmatpush.msra.mxu0 0.0
        %894 = vmatpush.msra.mxu0 0.0
        %895 = vmatpush.msra.mxu0 0.0
        %896 = vmatpush.msra.mxu0 0.0
        %897 = vmatpush.msra.mxu0 0.0
        %898 = vmatpush.msra.mxu0 0.0
        %899 = vmatpush.msra.mxu0 0.0
        %900 = vmatpush.msra.mxu0 0.0
        %901 = vmatpush.msra.mxu0 0.0
        %902 = vmatpush.msra.mxu0 0.0
        %903 = vmatpush.msra.mxu0 0.0
        %v904 = vand.u32 %v805, 4294901760
        %905 = vmatpush.msra.mxu0 %v904
        %v906 = vand.u32 %v804, 4294901760
        %907 = vmatpush.msra.mxu0 %v906
        %v908 = vand.u32 %v323, 4294901760
        %v909 = vsub.f32 %v323, %v908
        %v910 = vand.u32 %v909, 4294901760
        %911 = vmatmul.f32.gmra.mxu0 %v910
        %v912 = vpop.f32.mrf.mxu0
        %v913 = vadd.f32 %v888, %v912
        %914 = vdwg.mxu0
        %915 = vmatpush.msra.mxu0 0.0
        %916 = vmatpush.msra.mxu0 0.0
        %917 = vmatpush.msra.mxu0 0.0
        %918 = vmatpush.msra.mxu0 0.0
        %919 = vmatpush.msra.mxu0 0.0
        %920 = vmatpush.msra.mxu0 0.0
        %921 = vmatpush.msra.mxu0 0.0
        %922 = vmatpush.msra.mxu0 0.0
        %923 = vmatpush.msra.mxu0 0.0
        %924 = vmatpush.msra.mxu0 0.0
        %925 = vmatpush.msra.mxu0 0.0
        %926 = vmatpush.msra.mxu0 0.0
        %927 = vmatpush.msra.mxu0 0.0
        %928 = vmatpush.msra.mxu0 0.0
        %v929 = vand.u32 %v805, 4294901760
        %v930 = vsub.f32 %v805, %v929
        %v931 = vand.u32 %v930, 4294901760
        %932 = vmatpush.msra.mxu0 %v931
        %v933 = vand.u32 %v804, 4294901760
        %v934 = vsub.f32 %v804, %v933
        %v935 = vand.u32 %v934, 4294901760
        %936 = vmatpush.msra.mxu0 %v935
        %v937 = vand.u32 %v323, 4294901760
        %938 = vmatmul.f32.gmra.mxu0 %v937
        %v939 = vpop.f32.mrf.mxu0
        %v940 = vadd.f32 %v913, %v939
        %941 = vdwg.mxu0
        %942 = vmatpush.msra.mxu0 0.0
        %943 = vmatpush.msra.mxu0 0.0
        %944 = vmatpush.msra.mxu0 0.0
        %945 = vmatpush.msra.mxu0 0.0
        %946 = vmatpush.msra.mxu0 0.0
        %947 = vmatpush.msra.mxu0 0.0
        %948 = vmatpush.msra.mxu0 0.0
        %949 = vmatpush.msra.mxu0 0.0
        %950 = vmatpush.msra.mxu0 0.0
        %951 = vmatpush.msra.mxu0 0.0
        %952 = vmatpush.msra.mxu0 0.0
        %953 = vmatpush.msra.mxu0 0.0
        %954 = vmatpush.msra.mxu0 0.0
        %955 = vmatpush.msra.mxu0 0.0
        %v956 = vand.u32 %v805, 4294901760
        %957 = vmatpush.msra.mxu0 %v956
        %v958 = vand.u32 %v804, 4294901760
        %959 = vmatpush.msra.mxu0 %v958
        %v960 = vand.u32 %v323, 4294901760
        %961 = vmatmul.f32.gmra.mxu0 %v960
        %v962 = vpop.f32.mrf.mxu0
        %v963 = vadd.f32 %v940, %v962
        %964 = vdwg.mxu0
        %v965 = vmul.f32 %v315, %v317
        %v966 = vmul.f32 %v316, %v318
        %967 = vmatpush.msra.mxu0 0.0
        %968 = vmatpush.msra.mxu0 0.0
        %969 = vmatpush.msra.mxu0 0.0
        %970 = vmatpush.msra.mxu0 0.0
        %971 = vmatpush.msra.mxu0 0.0
        %972 = vmatpush.msra.mxu0 0.0
        %973 = vmatpush.msra.mxu0 0.0
        %974 = vmatpush.msra.mxu0 0.0
        %975 = vmatpush.msra.mxu0 0.0
        %976 = vmatpush.msra.mxu0 0.0
        %977 = vmatpush.msra.mxu0 0.0
        %978 = vmatpush.msra.mxu0 0.0
        %979 = vmatpush.msra.mxu0 0.0
        %980 = vmatpush.msra.mxu0 0.0
        %v981 = vand.u32 %v966, 4294901760
        %982 = vmatpush.msra.mxu0 %v981
        %v983 = vand.u32 %v965, 4294901760
        %984 = vmatpush.msra.mxu0 %v983
        %v985 = vand.u32 %v323, 4294901760
        %v986 = vsub.f32 %v323, %v985
        %v987 = vand.u32 %v986, 4294901760
        %v988 = vsub.f32 %v986, %v987
        %v989 = vand.u32 %v988, 4294901760
        %990 = vmatmul.f32.gmra.mxu0 %v989
        %v991 = vpop.f32.mrf.mxu0
        %v992 = vadd.f32 0.0, %v991
        %993 = vdwg.mxu0
        %994 = vmatpush.msra.mxu0 0.0
        %995 = vmatpush.msra.mxu0 0.0
        %996 = vmatpush.msra.mxu0 0.0
        %997 = vmatpush.msra.mxu0 0.0
        %998 = vmatpush.msra.mxu0 0.0
        %999 = vmatpush.msra.mxu0 0.0
        %1000 = vmatpush.msra.mxu0 0.0
        %1001 = vmatpush.msra.mxu0 0.0
        %1002 = vmatpush.msra.mxu0 0.0
        %1003 = vmatpush.msra.mxu0 0.0
        %1004 = vmatpush.msra.mxu0 0.0
        %1005 = vmatpush.msra.mxu0 0.0
        %1006 = vmatpush.msra.mxu0 0.0
        %1007 = vmatpush.msra.mxu0 0.0
        %v1008 = vand.u32 %v966, 4294901760
        %v1009 = vsub.f32 %v966, %v1008
        %v1010 = vand.u32 %v1009, 4294901760
        %v1011 = vsub.f32 %v1009, %v1010
        %v1012 = vand.u32 %v1011, 4294901760
        %1013 = vmatpush.msra.mxu0 %v1012
        %v1014 = vand.u32 %v965, 4294901760
        %v1015 = vsub.f32 %v965, %v1014
        %v1016 = vand.u32 %v1015, 4294901760
        %v1017 = vsub.f32 %v1015, %v1016
        %v1018 = vand.u32 %v1017, 4294901760
        %1019 = vmatpush.msra.mxu0 %v1018
        %v1020 = vand.u32 %v323, 4294901760
        %1021 = vmatmul.f32.gmra.mxu0 %v1020
        %v1022 = vpop.f32.mrf.mxu0
        %v1023 = vadd.f32 %v992, %v1022
        %1024 = vdwg.mxu0
        %1025 = vmatpush.msra.mxu0 0.0
        %1026 = vmatpush.msra.mxu0 0.0
        %1027 = vmatpush.msra.mxu0 0.0
        %1028 = vmatpush.msra.mxu0 0.0
        %1029 = vmatpush.msra.mxu0 0.0
        %1030 = vmatpush.msra.mxu0 0.0
        %1031 = vmatpush.msra.mxu0 0.0
        %1032 = vmatpush.msra.mxu0 0.0
        %1033 = vmatpush.msra.mxu0 0.0
        %1034 = vmatpush.msra.mxu0 0.0
        %1035 = vmatpush.msra.mxu0 0.0
        %1036 = vmatpush.msra.mxu0 0.0
        %1037 = vmatpush.msra.mxu0 0.0
        %1038 = vmatpush.msra.mxu0 0.0
        %v1039 = vand.u32 %v966, 4294901760
        %v1040 = vsub.f32 %v966, %v1039
        %1041 = vmatpush.msra.mxu0 %v1040
        %v1042 = vand.u32 %v965, 4294901760
        %v1043 = vsub.f32 %v965, %v1042
        %1044 = vmatpush.msra.mxu0 %v1043
        %v1045 = vand.u32 %v323, 4294901760
        %v1046 = vsub.f32 %v323, %v1045
        %1047 = vmatmul.f32.gmra.mxu0 %v1046
        %v1048 = vpop.f32.mrf.mxu0
        %v1049 = vadd.f32 %v1023, %v1048
        %1050 = vdwg.mxu0
        %1051 = vmatpush.msra.mxu0 0.0
        %1052 = vmatpush.msra.mxu0 0.0
        %1053 = vmatpush.msra.mxu0 0.0
        %1054 = vmatpush.msra.mxu0 0.0
        %1055 = vmatpush.msra.mxu0 0.0
        %1056 = vmatpush.msra.mxu0 0.0
        %1057 = vmatpush.msra.mxu0 0.0
        %1058 = vmatpush.msra.mxu0 0.0
        %1059 = vmatpush.msra.mxu0 0.0
        %1060 = vmatpush.msra.mxu0 0.0
        %1061 = vmatpush.msra.mxu0 0.0
        %1062 = vmatpush.msra.mxu0 0.0
        %1063 = vmatpush.msra.mxu0 0.0
        %1064 = vmatpush.msra.mxu0 0.0
        %v1065 = vand.u32 %v966, 4294901760
        %1066 = vmatpush.msra.mxu0 %v1065
        %v1067 = vand.u32 %v965, 4294901760
        %1068 = vmatpush.msra.mxu0 %v1067
        %v1069 = vand.u32 %v323, 4294901760
        %v1070 = vsub.f32 %v323, %v1069
        %v1071 = vand.u32 %v1070, 4294901760
        %1072 = vmatmul.f32.gmra.mxu0 %v1071
        %v1073 = vpop.f32.mrf.mxu0
        %v1074 = vadd.f32 %v1049, %v1073
        %1075 = vdwg.mxu0
        %1076 = vmatpush.msra.mxu0 0.0
        %1077 = vmatpush.msra.mxu0 0.0
        %1078 = vmatpush.msra.mxu0 0.0
        %1079 = vmatpush.msra.mxu0 0.0
        %1080 = vmatpush.msra.mxu0 0.0
        %1081 = vmatpush.msra.mxu0 0.0
        %1082 = vmatpush.msra.mxu0 0.0
        %1083 = vmatpush.msra.mxu0 0.0
        %1084 = vmatpush.msra.mxu0 0.0
        %1085 = vmatpush.msra.mxu0 0.0
        %1086 = vmatpush.msra.mxu0 0.0
        %1087 = vmatpush.msra.mxu0 0.0
        %1088 = vmatpush.msra.mxu0 0.0
        %1089 = vmatpush.msra.mxu0 0.0
        %v1090 = vand.u32 %v966, 4294901760
        %v1091 = vsub.f32 %v966, %v1090
        %v1092 = vand.u32 %v1091, 4294901760
        %1093 = vmatpush.msra.mxu0 %v1092
        %v1094 = vand.u32 %v965, 4294901760
        %v1095 = vsub.f32 %v965, %v1094
        %v1096 = vand.u32 %v1095, 4294901760
        %1097 = vmatpush.msra.mxu0 %v1096
        %v1098 = vand.u32 %v323, 4294901760
        %1099 = vmatmul.f32.gmra.mxu0 %v1098
        %v1100 = vpop.f32.mrf.mxu0
        %v1101 = vadd.f32 %v1074, %v1100
        %1102 = vdwg.mxu0
        %1103 = vmatpush.msra.mxu0 0.0
        %1104 = vmatpush.msra.mxu0 0.0
        %1105 = vmatpush.msra.mxu0 0.0
        %1106 = vmatpush.msra.mxu0 0.0
        %1107 = vmatpush.msra.mxu0 0.0
        %1108 = vmatpush.msra.mxu0 0.0
        %1109 = vmatpush.msra.mxu0 0.0
        %1110 = vmatpush.msra.mxu0 0.0
        %1111 = vmatpush.msra.mxu0 0.0
        %1112 = vmatpush.msra.mxu0 0.0
        %1113 = vmatpush.msra.mxu0 0.0
        %1114 = vmatpush.msra.mxu0 0.0
        %1115 = vmatpush.msra.mxu0 0.0
        %1116 = vmatpush.msra.mxu0 0.0
        %v1117 = vand.u32 %v966, 4294901760
        %1118 = vmatpush.msra.mxu0 %v1117
        %v1119 = vand.u32 %v965, 4294901760
        %1120 = vmatpush.msra.mxu0 %v1119
        %v1121 = vand.u32 %v323, 4294901760
        %1122 = vmatmul.f32.gmra.mxu0 %v1121
        %v1123 = vpop.f32.mrf.mxu0
        %v1124 = vadd.f32 %v1101, %v1123
        %1125 = vdwg.mxu0
        %vm1126 = vcmask 5120
        %1127 = vst.msk [vmem:[#allocation2] sm:$0x3f] %vm1126, 0.0
        %vm1128 = vcmask 275720
        %1129 = vst.msk [vmem:[#allocation2] sm:$0x3f] %vm1128, 0.0
        %1131 = vrot.lane.b32.xlu0 %v482, 1
        %v1132 = vpop.permute.xlu0 %1131
        %vm1134 = vcmask 267272
        %1135 = vst.msk [vmem:[#allocation2] sm:$0x3f] %vm1134, %v1132
        %v1136 = vld [vmem:[#allocation2] sm:$0x3f]
        %v1137 = vperm.slane %v320, 0
        %v1138 = vmul.f32 %v1137, %v1136
        %v1139 = vperm.slane %v320, 1
        %1141 = vrot.lane.b32.xlu0 %v1136, 127
        %v1142 = vpop.permute.xlu0 %1141
        %v1144 = vmul.f32 %v1139, %v1142
        %v1145 = vadd.f32 %v1138, %v1144
        %v1146 = vperm.slane %v320, 2
        %1147 = vrot.lane.b32.xlu0 %v1136, 126
        %v1148 = vpop.permute.xlu0 %1147
        %v1150 = vmul.f32 %v1146, %v1148
        %v1151 = vadd.f32 %v1145, %v1150
        %1153 = vrot.lane.b32.xlu0 %v641, 1
        %v1154 = vpop.permute.xlu0 %1153
        %1156 = vst.msk [vmem:[#allocation2] sm:$0x3f] %vm1134, %v1154
        %v1157 = vld [vmem:[#allocation2] sm:$0x3f]
        %v1158 = vmul.f32 %v1137, %v1157
        %1160 = vrot.lane.b32.xlu0 %v1157, 127
        %v1161 = vpop.permute.xlu0 %1160
        %v1163 = vmul.f32 %v1139, %v1161
        %v1164 = vadd.f32 %v1158, %v1163
        %1165 = vrot.lane.b32.xlu0 %v1157, 126
        %v1166 = vpop.permute.xlu0 %1165
        %v1168 = vmul.f32 %v1146, %v1166
        %v1169 = vadd.f32 %v1164, %v1168
        %1171 = vrot.lane.b32.xlu0 %v802, 1
        %v1172 = vpop.permute.xlu0 %1171
        %1174 = vst.msk [vmem:[#allocation2] sm:$0x3f] %vm1134, %v1172
        %v1175 = vld [vmem:[#allocation2] sm:$0x3f]
        %v1176 = vmul.f32 %v1137, %v1175
        %1178 = vrot.lane.b32.xlu0 %v1175, 127
        %v1179 = vpop.permute.xlu0 %1178
        %v1181 = vmul.f32 %v1139, %v1179
        %v1182 = vadd.f32 %v1176, %v1181
        %1183 = vrot.lane.b32.xlu0 %v1175, 126
        %v1184 = vpop.permute.xlu0 %1183
        %v1186 = vmul.f32 %v1146, %v1184
        %v1187 = vadd.f32 %v1182, %v1186
        %1189 = vrot.lane.b32.xlu0 %v963, 1
        %v1190 = vpop.permute.xlu0 %1189
        %1192 = vst.msk [vmem:[#allocation2] sm:$0x3f] %vm1134, %v1190
        %v1193 = vld [vmem:[#allocation2] sm:$0x3f]
        %v1194 = vmul.f32 %v1137, %v1193
        %1196 = vrot.lane.b32.xlu0 %v1193, 127
        %v1197 = vpop.permute.xlu0 %1196
        %v1199 = vmul.f32 %v1139, %v1197
        %v1200 = vadd.f32 %v1194, %v1199
        %1201 = vrot.lane.b32.xlu0 %v1193, 126
        %v1202 = vpop.permute.xlu0 %1201
        %v1204 = vmul.f32 %v1146, %v1202
        %v1205 = vadd.f32 %v1200, %v1204
        %1207 = vrot.lane.b32.xlu0 %v1124, 1
        %v1208 = vpop.permute.xlu0 %1207
        %1210 = vst.msk [vmem:[#allocation2] sm:$0x3f] %vm1134, %v1208
        %v1211 = vld [vmem:[#allocation2] sm:$0x3f]
        %v1212 = vmul.f32 %v1137, %v1211
        %1214 = vrot.lane.b32.xlu0 %v1211, 127
        %v1215 = vpop.permute.xlu0 %1214
        %v1217 = vmul.f32 %v1139, %v1215
        %v1218 = vadd.f32 %v1212, %v1217
        %1219 = vrot.lane.b32.xlu0 %v1211, 126
        %v1220 = vpop.permute.xlu0 %1219
        %v1222 = vmul.f32 %v1146, %v1220
        %v1223 = vadd.f32 %v1218, %v1222
        %v1224 = vmul.f32 %v1151, %v1151
        %v1225 = vmul.f32 %v1169, %v1169
        %v1226 = vmul.f32 %v1151, %v1169
        %v1227 = vsub.f32 %v1187, %v1224
        %v1228 = vsub.f32 %v1205, %v1225
        %v1229 = vsub.f32 %v1223, %v1226
        %v1230 = vmul.f32 %v1226, 2.0
        %v1231 = vadd.f32 %v1230, 0.0001
        %v1232 = vmul.f32 %v1229, 2.0
        %v1233 = vadd.f32 %v1232, 0.0009
        %v1234 = vmul.f32 %v1231, %v1233
        %v1235 = vadd.f32 %v1224, %v1225
        %v1236 = vadd.f32 %v1235, 0.0001
        %v1237 = vadd.f32 %v1227, %v1228
        %v1238 = vadd.f32 %v1237, 0.0009
        %v1239 = vmul.f32 %v1236, %v1238
        %v1240 = vrcp.pop %v1239
        %v1241 = vmul.f32 %v1234, %v1240
        %v1242 = vld [vmem:[%s4] sm:$0x1]
        %v1244 = vperm.slane %v1242, 0
        %v1246 = vmul.f32 %v1241, %v1244
        %vm1247 = vcmask 259072
        %v1248 = vsel %vm1247, %v1246, 0.0
        %v1249 = vrot.slane %v1248, 4
        %v1250 = vadd.f32 %v1248, %v1249
        %v1251 = vrot.slane %v1250, 2
        %v1252 = vadd.f32 %v1250, %v1251
        %v1253 = vrot.slane %v1252, 1
        %v1254 = vadd.f32 %v1252, %v1253
        %vm1255 = vcmask 253952
        %1256 = vst.msk [vmem:[%s314] sm:$0x1] %vm1255, %v1254
        %s1257 = sand.u32 %s149, 1
        %s1258 = scalar_lea.sflag [#allocation5], %s1257
        %s1259 = sand.u32 %s149, 1
        %s1260 = scalar_lea.vmem [#allocation11], %s1259
        // Predicated region
        $region57: #{tpu_custom_call.1} parent=39 // pred_check
          %p1261 = pneg %p159
        $region58: #{tpu_custom_call.1} parent=39 // pred_check_branch
          %1263 = sbr.rel (%p1261) target = $region60
        $region59: #{tpu_custom_call.1} parent=39 // pred_region
          %1265 = vsyncadd %s1258, 0
          %s1266 = scalar_lea.hbm %s5, %s26
          %s1268 = sshll.u32 %s1260, 4
          %s1269 = int_to_ptr.vmem [resolvable:$true] %s1268
          %s1270 = sshll.u32 %s1266, 4
          %s1271 = int_to_ptr.hbm [resolvable:$true] %s1270
          %1273 = dma.vmem_to_hbm [thread:$0]  %s1269, 16, %s1271, %s1258
        $region60: #{tpu_custom_call.1} parent=39 // pred_fallthru
          _
      $region40: #{tpu_custom_call.1} parent=5 // pred_fallthru
        _
      %p1274 = scmp.le.s32.totalorder 2, %s21
      // Predicated region
      $region61: #{tpu_custom_call.1} parent=5 // pred_check
        %p1275 = pneg %p1274
      $region62: #{tpu_custom_call.1} parent=5 // pred_check_branch
        %1277 = sbr.rel (%p1275) target = $region64
      $region63: #{tpu_custom_call.1} parent=5 // pred_region
        %s1278 = ssub.s32 %s21, 2
        // Predicated region
        $region65: #{tpu_custom_call.1} parent=63 // pred_check
          %p1279 = pneg %p165
        $region66: #{tpu_custom_call.1} parent=63 // pred_check_branch
          %1281 = sbr.rel (%p1279) target = $region68
        $region67: #{tpu_custom_call.1} parent=63 // pred_region
          %s1282 = sand.u32 %s150, 1
          %s1283 = scalar_lea.sflag [#allocation5], %s1282
          %s1284 = sand.u32 %s150, 1
          %s1285 = scalar_lea.vmem [#allocation11], %s1284
          %1287 = dma.done %s1283, 16
        $region68: #{tpu_custom_call.1} parent=63 // pred_fallthru
          _
      $region64: #{tpu_custom_call.1} parent=5 // pred_fallthru
        _
    $region6: #{tpu_custom_call.1} parent=1 // loop_footer
      %s25 = sadd.s32 1, %s21
    $region7: #{tpu_custom_call.1} parent=1 // loop_footer_branch
      %20 = sbr.rel target = $region3
    $region8: #{tpu_custom_call.1} parent=1 // loop_exit
      _
    %1288 = vsyncpa [#allocation4], 1
    %s1289 = scalar_lea.sflag [#allocation4], 1
    %1290 = vsyncpa %s1289, 1
    %1291 = vsyncpa [#allocation7], 1
    %s1292 = scalar_lea.sflag [#allocation7], 1
    %1293 = vsyncpa %s1292, 1
    %1294 = vsyncpa [#allocation10], 1
    %1295 = vsyncpa [#allocation5], 1
    %s1296 = scalar_lea.sflag [#allocation5], 1
    %1297 = vsyncpa %s1296, 1

</llo_original>
